<compile_context>
chip_gen: v7x
topology: tpu7x:2x2x1
jax: 0.10.0
libtpu: 0.0.40
codegen_flags: <defaults>
</compile_context>

<pallas_src>
from functools import partial

import jax
import jax.numpy as jnp
import numpy as np
from jax.experimental import pallas as pl
from jax.experimental.pallas import tpu as pltpu


def _layernorm_f32(v, g, b, eps=1e-5):
    # LayerNorm subclass in the module always computes in float32.
    v32 = v.astype(jnp.float32)
    mu = jnp.mean(v32, axis=-1, keepdims=True)
    var = jnp.mean((v32 - mu) ** 2, axis=-1, keepdims=True)
    return (v32 - mu) * jax.lax.rsqrt(var + eps) * g + b


def residual_attn_block_kernel(n_head,
                               x_ref,
                               wq_ref, wk_ref, wv_ref, bq_ref, bk_ref, bv_ref,
                               wo_ref, bo_ref,
                               g1_ref, be1_ref, g2_ref, be2_ref,
                               wfc_ref, bfc_ref, wpr_ref, bpr_ref,
                               o_ref,
                               attn_sc):
    Nb, L, D = x_ref.shape
    hd = D // n_head
    bf16 = jnp.bfloat16

    x = x_ref[...].astype(jnp.float32).reshape(Nb * L, D)          # (Nb*L, D)

    # ---------------- attention branch: x + attn(ln_1(x)) ----------------
    xn = _layernorm_f32(x, g1_ref[...], be1_ref[...])
    xn_b = xn.astype(bf16)
    # 1/sqrt(hd) is already folded into wq/bq by the wrapper.
    q = jnp.dot(xn_b, wq_ref[...], preferred_element_type=jnp.float32) + bq_ref[...]
    k = jnp.dot(xn_b, wk_ref[...], preferred_element_type=jnp.float32) + bk_ref[...]
    v = jnp.dot(xn_b, wv_ref[...], preferred_element_type=jnp.float32) + bv_ref[...]

    q3 = q.reshape(Nb, L, D).astype(bf16)
    k3 = k.reshape(Nb, L, D).astype(bf16)
    v3 = v.reshape(Nb, L, D).astype(bf16)

    # TODO(synk): if hd == 64 on v6e/v7x, process heads in pairs (128-lane
    # groups) to double MXU utilization of the score / PV matmuls.
    for h in range(n_head):                     # static unroll over heads
        sl = slice(h * hd, (h + 1) * hd)
        qh, kh, vh = q3[:, :, sl], k3[:, :, sl], v3[:, :, sl]
        s = jnp.einsum("bqd,bkd->bqk", qh, kh,
                       preferred_element_type=jnp.float32)         # (Nb, L, L)
        s = s - jnp.max(s, axis=-1, keepdims=True)
        p = jnp.exp(s)
        inv = pl.reciprocal(jnp.sum(p, axis=-1, keepdims=True), approx=True)
        p = (p * inv).astype(bf16)
        attn_sc[:, :, sl] = jnp.einsum("bqk,bkd->bqd", p, vh,
                                       preferred_element_type=jnp.float32)

    attn = attn_sc[...].reshape(Nb * L, D).astype(bf16)
    x = x + jnp.dot(attn, wo_ref[...],
                    preferred_element_type=jnp.float32) + bo_ref[...]

    # ---------------- MLP branch: x + mlp(ln_2(x)) ----------------
    xn2 = _layernorm_f32(x, g2_ref[...], be2_ref[...])
    h1 = jnp.dot(xn2.astype(bf16), wfc_ref[...],
                 preferred_element_type=jnp.float32) + bfc_ref[...]
    h1 = h1 * jax.nn.sigmoid(1.702 * h1)        # QuickGELU, f32 on the VPU/EUP
    h2 = jnp.dot(h1.astype(bf16), wpr_ref[...],
                 preferred_element_type=jnp.float32) + bpr_ref[...]

    o_ref[...] = (x + h2).reshape(Nb, L, D).astype(o_ref.dtype)


def residual_attention_block(x, params, n_head, batch_block=2):
    """x: (N, L, D).  params: f32 weights already transposed so kernel does x @ W."""
    N, L, D = x.shape
    hd = D // n_head
    scale = 1.0 / (hd ** 0.5)

    # Pick a batch block that divides N (keep grid >= 2 when possible for megacore).
    Nb = max(1, min(batch_block, N))
    while N % Nb:
        Nb -= 1

    (wq, wk, wv, bq, bk, bv, wo, bo,
     g1, be1, g2, be2, wfc, bfc, wpr, bpr) = params

    bf16, f32 = jnp.bfloat16, jnp.float32
    # Fold 1/sqrt(hd) into the Q projection once at trace time; weights -> bf16,
    # biases / LN params stay f32.
    kparams = (
        (wq * scale).astype(bf16), wk.astype(bf16), wv.astype(bf16),
        (bq * scale).astype(f32), bq := bq.astype(f32) * 0 + bq.astype(f32),  # placeholder replaced below
    )
    # (build explicitly to keep ordering obvious)
    kparams = (
        (wq * scale).astype(bf16), wk.astype(bf16), wv.astype(bf16),
        (bq * scale).astype(f32), bk.astype(f32), bv.astype(f32),
        wo.astype(bf16), bo.astype(f32),
        g1.astype(f32), be1.astype(f32), g2.astype(f32), be2.astype(f32),
        wfc.astype(bf16), bfc.astype(f32), wpr.astype(bf16), bpr.astype(f32),
    )

    def full_spec(p):
        nd = p.ndim
        return pl.BlockSpec(p.shape, lambda b, _nd=nd: (0,) * _nd)

    in_specs = ([pl.BlockSpec((Nb, L, D), lambda b: (b, 0, 0))]
                + [full_spec(p) for p in kparams])
    out_specs = pl.BlockSpec((Nb, L, D), lambda b: (b, 0, 0))

    # VMEM budget: weights (double-buffered by the pipeline) + in/out activation
    # blocks + f32 working set.  Clamp to [32 MiB, 64 MiB] so it is valid on
    # v5e/v6e (128 MiB physical) and v7x (64 MiB physical).
    weight_bytes = sum(int(np.prod(p.shape)) * p.dtype.itemsize for p in kparams)
    block_bytes = Nb * L * D * 4
    est = 2 * weight_bytes + 8 * block_bytes + 2 * Nb * L * 4 * D * 4
    vmem_limit = int(min(max(2 * est, 32 << 20), 64 << 20))

    cost = pl.CostEstimate(
        flops=int(N * L * (24 * D * D + 4 * L * D)),
        transcendentals=int(N * L * (n_head * L + 4 * D)),
        bytes_accessed=int(2 * x.size * x.dtype.itemsize + weight_bytes),
    )

    return pl.pallas_call(
        partial(residual_attn_block_kernel, n_head),
        out_shape=jax.ShapeDtypeStruct((N, L, D), x.dtype),
        grid=(N // Nb,),
        in_specs=in_specs,
        out_specs=out_specs,
        scratch_shapes=[pltpu.VMEM((Nb, L, D), jnp.float32)],
        compiler_params=pltpu.CompilerParams(
            dimension_semantics=("parallel",),
            vmem_limit_bytes=vmem_limit),
        cost_estimate=cost,
    )(x, *kparams)


def reference_block(x, params, n_head):
    """Pure-JAX f32 reference replicating the PyTorch forward (for verification)."""
    (wq, wk, wv, bq, bk, bv, wo, bo, g1, be1, g2, be2, wfc, bfc, wpr, bpr) = params
    N, L, D = x.shape
    hd = D // n_head
    scale = 1.0 / (hd ** 0.5)

    def ln(v, g, b):
        mu = jnp.mean(v, axis=-1, keepdims=True)
        var = jnp.mean((v - mu) ** 2, axis=-1, keepdims=True)
        return (v - mu) * jax.lax.rsqrt(var + 1e-5) * g + b

    xn = ln(x, g1, be1)
    q = (xn @ wq + bq).reshape(N, L, n_head, hd)
    k = (xn @ wk + bk).reshape(N, L, n_head, hd)
    v = (xn @ wv + bv).reshape(N, L, n_head, hd)
    s = jnp.einsum("nlhd,nmhd->nhlm", q * scale, k)
    p = jax.nn.softmax(s, axis=-1)
    a = jnp.einsum("nhlm,nmhd->nlhd", p, v).reshape(N, L, D)
    x = x + (a @ wo + bo)

    xn2 = ln(x, g2, be2)
    h1 = xn2 @ wfc + bfc
    h1 = h1 * jax.nn.sigmoid(1.702 * h1)
    return x + (h1 @ wpr + bpr)


if __name__ == "__main__":
    # Small shapes consistent with the module: batch=4, seq=16, d_model=64, 4 heads.
    N, L, D, n_head = 4, 16, 64, 4

    key = jax.random.PRNGKey(0)
    ks = jax.random.split(key, 12)

    def w(k, shape, s=0.05):
        return jax.random.normal(k, shape, jnp.float32) * s

    # Weights stored pre-transposed: kernel computes x @ W  (W: (in, out)).
    wq = w(ks[0], (D, D));  wk = w(ks[1], (D, D));  wv = w(ks[2], (D, D))
    bq = w(ks[3], (1, D));  bk = w(ks[4], (1, D));  bv = w(ks[5], (1, D))
    wo = w(ks[6], (D, D));  bo = w(ks[7], (1, D))
    g1 = jnp.ones((1, D), jnp.float32);  be1 = jnp.zeros((1, D), jnp.float32)
    g2 = jnp.ones((1, D), jnp.float32);  be2 = jnp.zeros((1, D), jnp.float32)
    wfc = w(ks[8], (D, 4 * D));  bfc = w(ks[9], (1, 4 * D))
    wpr = w(ks[10], (4 * D, D)); bpr = w(ks[11], (1, D))

    params = (wq, wk, wv, bq, bk, bv, wo, bo, g1, be1, g2, be2, wfc, bfc, wpr, bpr)

    x = jax.random.normal(jax.random.PRNGKey(1), (N, L, D), jnp.float32)

    out = residual_attention_block(x, params, n_head, batch_block=2)
    out = jax.block_until_ready(out)

    ref = reference_block(x, params, n_head)
    # Tolerance accounts for bf16 matmul operands + approx reciprocal in the kernel
    # vs. the all-f32 reference.
    np.testing.assert_allclose(np.asarray(out), np.asarray(ref), rtol=2e-2, atol=2e-2)

    print("KERNEL_OK")
</pallas_src>

<mosaic_0001>
module attributes {stable_mosaic.version = 11 : i64} {
  func.func @residual_attn_block_kernel(%arg0: i32, %arg1: memref<2x16x64xf32, #tpu.memory_space<vmem>>, %arg2: memref<64x64xbf16, #tpu.memory_space<vmem>>, %arg3: memref<64x64xbf16, #tpu.memory_space<vmem>>, %arg4: memref<64x64xbf16, #tpu.memory_space<vmem>>, %arg5: memref<1x64xf32, #tpu.memory_space<vmem>>, %arg6: memref<1x64xf32, #tpu.memory_space<vmem>>, %arg7: memref<1x64xf32, #tpu.memory_space<vmem>>, %arg8: memref<64x64xbf16, #tpu.memory_space<vmem>>, %arg9: memref<1x64xf32, #tpu.memory_space<vmem>>, %arg10: memref<1x64xf32, #tpu.memory_space<vmem>>, %arg11: memref<1x64xf32, #tpu.memory_space<vmem>>, %arg12: memref<1x64xf32, #tpu.memory_space<vmem>>, %arg13: memref<1x64xf32, #tpu.memory_space<vmem>>, %arg14: memref<64x256xbf16, #tpu.memory_space<vmem>>, %arg15: memref<1x256xf32, #tpu.memory_space<vmem>>, %arg16: memref<256x64xbf16, #tpu.memory_space<vmem>>, %arg17: memref<1x64xf32, #tpu.memory_space<vmem>>, %arg18: memref<2x16x64xf32, #tpu.memory_space<vmem>>, %arg19: memref<2x16x64xf32, #tpu.memory_space<vmem>>) attributes {dimension_semantics = [#tpu.dimension_semantics<parallel>], iteration_bounds = array<i64: 2>, scalar_prefetch = 0 : i64, scratch_operands = 1 : i64, tpu.core_type = #tpu.core_type<tc>, window_params = [{transform_indices = @transform_0, window_bounds = array<i64: 2, 16, 64>}, {pipeline_mode = #tpu.pipeline_mode<synchronous>, transform_indices = @transform_1, window_bounds = array<i64: 64, 64>}, {pipeline_mode = #tpu.pipeline_mode<synchronous>, transform_indices = @transform_2, window_bounds = array<i64: 64, 64>}, {pipeline_mode = #tpu.pipeline_mode<synchronous>, transform_indices = @transform_3, window_bounds = array<i64: 64, 64>}, {pipeline_mode = #tpu.pipeline_mode<synchronous>, transform_indices = @transform_4, window_bounds = array<i64: 1, 64>}, {pipeline_mode = #tpu.pipeline_mode<synchronous>, transform_indices = @transform_5, window_bounds = array<i64: 1, 64>}, {pipeline_mode = #tpu.pipeline_mode<synchronous>, transform_indices = @transform_6, window_bounds = array<i64: 1, 64>}, {pipeline_mode = #tpu.pipeline_mode<synchronous>, transform_indices = @transform_7, window_bounds = array<i64: 64, 64>}, {pipeline_mode = #tpu.pipeline_mode<synchronous>, transform_indices = @transform_8, window_bounds = array<i64: 1, 64>}, {pipeline_mode = #tpu.pipeline_mode<synchronous>, transform_indices = @transform_9, window_bounds = array<i64: 1, 64>}, {pipeline_mode = #tpu.pipeline_mode<synchronous>, transform_indices = @transform_10, window_bounds = array<i64: 1, 64>}, {pipeline_mode = #tpu.pipeline_mode<synchronous>, transform_indices = @transform_11, window_bounds = array<i64: 1, 64>}, {pipeline_mode = #tpu.pipeline_mode<synchronous>, transform_indices = @transform_12, window_bounds = array<i64: 1, 64>}, {pipeline_mode = #tpu.pipeline_mode<synchronous>, transform_indices = @transform_13, window_bounds = array<i64: 64, 256>}, {pipeline_mode = #tpu.pipeline_mode<synchronous>, transform_indices = @transform_14, window_bounds = array<i64: 1, 256>}, {pipeline_mode = #tpu.pipeline_mode<synchronous>, transform_indices = @transform_15, window_bounds = array<i64: 256, 64>}, {pipeline_mode = #tpu.pipeline_mode<synchronous>, transform_indices = @transform_16, window_bounds = array<i64: 1, 64>}, {transform_indices = @transform_17, window_bounds = array<i64: 2, 16, 64>}]} {
    %c0 = arith.constant 0 : index
    %c0_0 = arith.constant 0 : index
    %c0_1 = arith.constant 0 : index
    %0 = vector.load %arg1[%c0, %c0_0, %c0_1] : memref<2x16x64xf32, #tpu.memory_space<vmem>>, vector<2x16x64xf32>
    %1 = vector.shape_cast %0 : vector<2x16x64xf32> to vector<32x64xf32>
    %c0_2 = arith.constant 0 : index
    %c0_3 = arith.constant 0 : index
    %2 = vector.load %arg10[%c0_2, %c0_3] : memref<1x64xf32, #tpu.memory_space<vmem>>, vector<1x64xf32>
    %c0_4 = arith.constant 0 : index
    %c0_5 = arith.constant 0 : index
    %3 = vector.load %arg11[%c0_4, %c0_5] : memref<1x64xf32, #tpu.memory_space<vmem>>, vector<1x64xf32>
    %cst = arith.constant dense<0.000000e+00> : vector<32xf32>
    %4 = vector.multi_reduction <add>, %1, %cst [1] : vector<32x64xf32> to vector<32xf32>
    %5 = vector.shape_cast %4 : vector<32xf32> to vector<32x1xf32>
    %cst_6 = arith.constant 6.400000e+01 : f32
    %6 = vector.broadcast %cst_6 : f32 to vector<32x1xf32>
    %7 = arith.divf %5, %6 : vector<32x1xf32>
    %8 = vector.broadcast %7 : vector<32x1xf32> to vector<32x64xf32>
    %9 = arith.subf %1, %8 : vector<32x64xf32>
    %10 = arith.mulf %9, %9 : vector<32x64xf32>
    %cst_7 = arith.constant dense<0.000000e+00> : vector<32xf32>
    %11 = vector.multi_reduction <add>, %10, %cst_7 [1] : vector<32x64xf32> to vector<32xf32>
    %12 = vector.shape_cast %11 : vector<32xf32> to vector<32x1xf32>
    %cst_8 = arith.constant 6.400000e+01 : f32
    %13 = vector.broadcast %cst_8 : f32 to vector<32x1xf32>
    %14 = arith.divf %12, %13 : vector<32x1xf32>
    %15 = vector.broadcast %7 : vector<32x1xf32> to vector<32x64xf32>
    %16 = arith.subf %1, %15 : vector<32x64xf32>
    %cst_9 = arith.constant 9.99999974E-6 : f32
    %17 = vector.broadcast %cst_9 : f32 to vector<32x1xf32>
    %18 = arith.addf %14, %17 : vector<32x1xf32>
    %19 = math.rsqrt %18 : vector<32x1xf32>
    %20 = vector.broadcast %19 : vector<32x1xf32> to vector<32x64xf32>
    %21 = arith.mulf %16, %20 : vector<32x64xf32>
    %22 = vector.broadcast %2 : vector<1x64xf32> to vector<32x64xf32>
    %23 = arith.mulf %21, %22 : vector<32x64xf32>
    %24 = vector.broadcast %3 : vector<1x64xf32> to vector<32x64xf32>
    %25 = arith.addf %23, %24 : vector<32x64xf32>
    %26 = arith.truncf %25 : vector<32x64xf32> to vector<32x64xbf16>
    %c0_10 = arith.constant 0 : index
    %c0_11 = arith.constant 0 : index
    %27 = vector.load %arg2[%c0_10, %c0_11] : memref<64x64xbf16, #tpu.memory_space<vmem>>, vector<64x64xbf16>
    %cst_12 = arith.constant dense<0.000000e+00> : vector<32x64xf32>
    %28 = tpu.matmul %26, %27, %cst_12 {dimension_numbers = #tpu.dot_dimension_numbers<[1], [0], [0], [1], [0, 0, 1, 1], [], []>} : vector<32x64xbf16>, vector<64x64xbf16>, vector<32x64xf32> -> vector<32x64xf32>
    %c0_13 = arith.constant 0 : index
    %c0_14 = arith.constant 0 : index
    %29 = vector.load %arg5[%c0_13, %c0_14] : memref<1x64xf32, #tpu.memory_space<vmem>>, vector<1x64xf32>
    %30 = vector.broadcast %29 : vector<1x64xf32> to vector<32x64xf32>
    %31 = arith.addf %28, %30 : vector<32x64xf32>
    %c0_15 = arith.constant 0 : index
    %c0_16 = arith.constant 0 : index
    %32 = vector.load %arg3[%c0_15, %c0_16] : memref<64x64xbf16, #tpu.memory_space<vmem>>, vector<64x64xbf16>
    %cst_17 = arith.constant dense<0.000000e+00> : vector<32x64xf32>
    %33 = tpu.matmul %26, %32, %cst_17 {dimension_numbers = #tpu.dot_dimension_numbers<[1], [0], [0], [1], [0, 0, 1, 1], [], []>} : vector<32x64xbf16>, vector<64x64xbf16>, vector<32x64xf32> -> vector<32x64xf32>
    %c0_18 = arith.constant 0 : index
    %c0_19 = arith.constant 0 : index
    %34 = vector.load %arg6[%c0_18, %c0_19] : memref<1x64xf32, #tpu.memory_space<vmem>>, vector<1x64xf32>
    %35 = vector.broadcast %34 : vector<1x64xf32> to vector<32x64xf32>
    %36 = arith.addf %33, %35 : vector<32x64xf32>
    %c0_20 = arith.constant 0 : index
    %c0_21 = arith.constant 0 : index
    %37 = vector.load %arg4[%c0_20, %c0_21] : memref<64x64xbf16, #tpu.memory_space<vmem>>, vector<64x64xbf16>
    %cst_22 = arith.constant dense<0.000000e+00> : vector<32x64xf32>
    %38 = tpu.matmul %26, %37, %cst_22 {dimension_numbers = #tpu.dot_dimension_numbers<[1], [0], [0], [1], [0, 0, 1, 1], [], []>} : vector<32x64xbf16>, vector<64x64xbf16>, vector<32x64xf32> -> vector<32x64xf32>
    %c0_23 = arith.constant 0 : index
    %c0_24 = arith.constant 0 : index
    %39 = vector.load %arg7[%c0_23, %c0_24] : memref<1x64xf32, #tpu.memory_space<vmem>>, vector<1x64xf32>
    %40 = vector.broadcast %39 : vector<1x64xf32> to vector<32x64xf32>
    %41 = arith.addf %38, %40 : vector<32x64xf32>
    %42 = vector.shape_cast %31 : vector<32x64xf32> to vector<2x16x64xf32>
    %43 = arith.truncf %42 : vector<2x16x64xf32> to vector<2x16x64xbf16>
    %44 = vector.shape_cast %36 : vector<32x64xf32> to vector<2x16x64xf32>
    %45 = arith.truncf %44 : vector<2x16x64xf32> to vector<2x16x64xbf16>
    %46 = vector.shape_cast %41 : vector<32x64xf32> to vector<2x16x64xf32>
    %47 = arith.truncf %46 : vector<2x16x64xf32> to vector<2x16x64xbf16>
    %48 = vector.extract_strided_slice %43 {offsets = [0, 0, 0], sizes = [2, 16, 16], strides = [1, 1, 1]} : vector<2x16x64xbf16> to vector<2x16x16xbf16>
    %49 = vector.extract_strided_slice %45 {offsets = [0, 0, 0], sizes = [2, 16, 16], strides = [1, 1, 1]} : vector<2x16x64xbf16> to vector<2x16x16xbf16>
    %50 = vector.extract_strided_slice %47 {offsets = [0, 0, 0], sizes = [2, 16, 16], strides = [1, 1, 1]} : vector<2x16x64xbf16> to vector<2x16x16xbf16>
    "tpu.trace_start"() <{level = 10 : i32, message = "bqd,bkd->bqk"}> : () -> ()
    %cst_25 = arith.constant dense<0.000000e+00> : vector<2x16x16xf32>
    %51 = tpu.matmul %48, %49, %cst_25 {dimension_numbers = #tpu.dot_dimension_numbers<[2], [2], [1], [1], [0, 0, 0, 1, 1, 1], [0], [0]>} : vector<2x16x16xbf16>, vector<2x16x16xbf16>, vector<2x16x16xf32> -> vector<2x16x16xf32>
    "tpu.trace_stop"() : () -> ()
    %cst_26 = arith.constant dense<0xFF800000> : vector<2x16xf32>
    %52 = vector.multi_reduction <maximumf>, %51, %cst_26 [2] : vector<2x16x16xf32> to vector<2x16xf32>
    %53 = vector.shape_cast %52 : vector<2x16xf32> to vector<2x16x1xf32>
    %54 = vector.broadcast %53 : vector<2x16x1xf32> to vector<2x16x16xf32>
    %55 = arith.subf %51, %54 : vector<2x16x16xf32>
    %56 = math.exp %55 : vector<2x16x16xf32>
    %cst_27 = arith.constant dense<0.000000e+00> : vector<2x16xf32>
    %57 = vector.multi_reduction <add>, %56, %cst_27 [2] : vector<2x16x16xf32> to vector<2x16xf32>
    %58 = vector.shape_cast %57 : vector<2x16xf32> to vector<2x16x1xf32>
    %59 = tpu.reciprocal %58 {approx = true} : vector<2x16x1xf32> -> vector<2x16x1xf32>
    %60 = vector.broadcast %59 : vector<2x16x1xf32> to vector<2x16x16xf32>
    %61 = arith.mulf %56, %60 : vector<2x16x16xf32>
    %62 = arith.truncf %61 : vector<2x16x16xf32> to vector<2x16x16xbf16>
    "tpu.trace_start"() <{level = 10 : i32, message = "bqk,bkd->bqd"}> : () -> ()
    %cst_28 = arith.constant dense<0.000000e+00> : vector<2x16x16xf32>
    %63 = tpu.matmul %62, %50, %cst_28 {dimension_numbers = #tpu.dot_dimension_numbers<[2], [1], [1], [2], [0, 0, 0, 1, 1, 2], [0], [0]>} : vector<2x16x16xbf16>, vector<2x16x16xbf16>, vector<2x16x16xf32> -> vector<2x16x16xf32>
    "tpu.trace_stop"() : () -> ()
    %c0_29 = arith.constant 0 : index
    %c0_30 = arith.constant 0 : index
    %c0_31 = arith.constant 0 : index
    %64 = vector.load %arg19[%c0_29, %c0_30, %c0_31] : memref<2x16x64xf32, #tpu.memory_space<vmem>>, vector<2x16x16xf32>
    tpu.vector_store %arg19[%c0_29, %c0_30, %c0_31], %63 {strides = array<i32>} : memref<2x16x64xf32, #tpu.memory_space<vmem>>, vector<2x16x16xf32>,
    %65 = vector.extract_strided_slice %43 {offsets = [0, 0, 16], sizes = [2, 16, 16], strides = [1, 1, 1]} : vector<2x16x64xbf16> to vector<2x16x16xbf16>
    %66 = vector.extract_strided_slice %45 {offsets = [0, 0, 16], sizes = [2, 16, 16], strides = [1, 1, 1]} : vector<2x16x64xbf16> to vector<2x16x16xbf16>
    %67 = vector.extract_strided_slice %47 {offsets = [0, 0, 16], sizes = [2, 16, 16], strides = [1, 1, 1]} : vector<2x16x64xbf16> to vector<2x16x16xbf16>
    "tpu.trace_start"() <{level = 10 : i32, message = "bqd,bkd->bqk"}> : () -> ()
    %cst_32 = arith.constant dense<0.000000e+00> : vector<2x16x16xf32>
    %68 = tpu.matmul %65, %66, %cst_32 {dimension_numbers = #tpu.dot_dimension_numbers<[2], [2], [1], [1], [0, 0, 0, 1, 1, 1], [0], [0]>} : vector<2x16x16xbf16>, vector<2x16x16xbf16>, vector<2x16x16xf32> -> vector<2x16x16xf32>
    "tpu.trace_stop"() : () -> ()
    %cst_33 = arith.constant dense<0xFF800000> : vector<2x16xf32>
    %69 = vector.multi_reduction <maximumf>, %68, %cst_33 [2] : vector<2x16x16xf32> to vector<2x16xf32>
    %70 = vector.shape_cast %69 : vector<2x16xf32> to vector<2x16x1xf32>
    %71 = vector.broadcast %70 : vector<2x16x1xf32> to vector<2x16x16xf32>
    %72 = arith.subf %68, %71 : vector<2x16x16xf32>
    %73 = math.exp %72 : vector<2x16x16xf32>
    %cst_34 = arith.constant dense<0.000000e+00> : vector<2x16xf32>
    %74 = vector.multi_reduction <add>, %73, %cst_34 [2] : vector<2x16x16xf32> to vector<2x16xf32>
    %75 = vector.shape_cast %74 : vector<2x16xf32> to vector<2x16x1xf32>
    %76 = tpu.reciprocal %75 {approx = true} : vector<2x16x1xf32> -> vector<2x16x1xf32>
    %77 = vector.broadcast %76 : vector<2x16x1xf32> to vector<2x16x16xf32>
    %78 = arith.mulf %73, %77 : vector<2x16x16xf32>
    %79 = arith.truncf %78 : vector<2x16x16xf32> to vector<2x16x16xbf16>
    "tpu.trace_start"() <{level = 10 : i32, message = "bqk,bkd->bqd"}> : () -> ()
    %cst_35 = arith.constant dense<0.000000e+00> : vector<2x16x16xf32>
    %80 = tpu.matmul %79, %67, %cst_35 {dimension_numbers = #tpu.dot_dimension_numbers<[2], [1], [1], [2], [0, 0, 0, 1, 1, 2], [0], [0]>} : vector<2x16x16xbf16>, vector<2x16x16xbf16>, vector<2x16x16xf32> -> vector<2x16x16xf32>
    "tpu.trace_stop"() : () -> ()
    %c0_36 = arith.constant 0 : index
    %c0_37 = arith.constant 0 : index
    %c16 = arith.constant 16 : index
    %81 = vector.load %arg19[%c0_36, %c0_37, %c16] : memref<2x16x64xf32, #tpu.memory_space<vmem>>, vector<2x16x16xf32>
    tpu.vector_store %arg19[%c0_36, %c0_37, %c16], %80 {strides = array<i32>} : memref<2x16x64xf32, #tpu.memory_space<vmem>>, vector<2x16x16xf32>,
    %82 = vector.extract_strided_slice %43 {offsets = [0, 0, 32], sizes = [2, 16, 16], strides = [1, 1, 1]} : vector<2x16x64xbf16> to vector<2x16x16xbf16>
    %83 = vector.extract_strided_slice %45 {offsets = [0, 0, 32], sizes = [2, 16, 16], strides = [1, 1, 1]} : vector<2x16x64xbf16> to vector<2x16x16xbf16>
    %84 = vector.extract_strided_slice %47 {offsets = [0, 0, 32], sizes = [2, 16, 16], strides = [1, 1, 1]} : vector<2x16x64xbf16> to vector<2x16x16xbf16>
    "tpu.trace_start"() <{level = 10 : i32, message = "bqd,bkd->bqk"}> : () -> ()
    %cst_38 = arith.constant dense<0.000000e+00> : vector<2x16x16xf32>
    %85 = tpu.matmul %82, %83, %cst_38 {dimension_numbers = #tpu.dot_dimension_numbers<[2], [2], [1], [1], [0, 0, 0, 1, 1, 1], [0], [0]>} : vector<2x16x16xbf16>, vector<2x16x16xbf16>, vector<2x16x16xf32> -> vector<2x16x16xf32>
    "tpu.trace_stop"() : () -> ()
    %cst_39 = arith.constant dense<0xFF800000> : vector<2x16xf32>
    %86 = vector.multi_reduction <maximumf>, %85, %cst_39 [2] : vector<2x16x16xf32> to vector<2x16xf32>
    %87 = vector.shape_cast %86 : vector<2x16xf32> to vector<2x16x1xf32>
    %88 = vector.broadcast %87 : vector<2x16x1xf32> to vector<2x16x16xf32>
    %89 = arith.subf %85, %88 : vector<2x16x16xf32>
    %90 = math.exp %89 : vector<2x16x16xf32>
    %cst_40 = arith.constant dense<0.000000e+00> : vector<2x16xf32>
    %91 = vector.multi_reduction <add>, %90, %cst_40 [2] : vector<2x16x16xf32> to vector<2x16xf32>
    %92 = vector.shape_cast %91 : vector<2x16xf32> to vector<2x16x1xf32>
    %93 = tpu.reciprocal %92 {approx = true} : vector<2x16x1xf32> -> vector<2x16x1xf32>
    %94 = vector.broadcast %93 : vector<2x16x1xf32> to vector<2x16x16xf32>
    %95 = arith.mulf %90, %94 : vector<2x16x16xf32>
    %96 = arith.truncf %95 : vector<2x16x16xf32> to vector<2x16x16xbf16>
    "tpu.trace_start"() <{level = 10 : i32, message = "bqk,bkd->bqd"}> : () -> ()
    %cst_41 = arith.constant dense<0.000000e+00> : vector<2x16x16xf32>
    %97 = tpu.matmul %96, %84, %cst_41 {dimension_numbers = #tpu.dot_dimension_numbers<[2], [1], [1], [2], [0, 0, 0, 1, 1, 2], [0], [0]>} : vector<2x16x16xbf16>, vector<2x16x16xbf16>, vector<2x16x16xf32> -> vector<2x16x16xf32>
    "tpu.trace_stop"() : () -> ()
    %c0_42 = arith.constant 0 : index
    %c0_43 = arith.constant 0 : index
    %c32 = arith.constant 32 : index
    %98 = vector.load %arg19[%c0_42, %c0_43, %c32] : memref<2x16x64xf32, #tpu.memory_space<vmem>>, vector<2x16x16xf32>
    tpu.vector_store %arg19[%c0_42, %c0_43, %c32], %97 {strides = array<i32>} : memref<2x16x64xf32, #tpu.memory_space<vmem>>, vector<2x16x16xf32>,
    %99 = vector.extract_strided_slice %43 {offsets = [0, 0, 48], sizes = [2, 16, 16], strides = [1, 1, 1]} : vector<2x16x64xbf16> to vector<2x16x16xbf16>
    %100 = vector.extract_strided_slice %45 {offsets = [0, 0, 48], sizes = [2, 16, 16], strides = [1, 1, 1]} : vector<2x16x64xbf16> to vector<2x16x16xbf16>
    %101 = vector.extract_strided_slice %47 {offsets = [0, 0, 48], sizes = [2, 16, 16], strides = [1, 1, 1]} : vector<2x16x64xbf16> to vector<2x16x16xbf16>
    "tpu.trace_start"() <{level = 10 : i32, message = "bqd,bkd->bqk"}> : () -> ()
    %cst_44 = arith.constant dense<0.000000e+00> : vector<2x16x16xf32>
    %102 = tpu.matmul %99, %100, %cst_44 {dimension_numbers = #tpu.dot_dimension_numbers<[2], [2], [1], [1], [0, 0, 0, 1, 1, 1], [0], [0]>} : vector<2x16x16xbf16>, vector<2x16x16xbf16>, vector<2x16x16xf32> -> vector<2x16x16xf32>
    "tpu.trace_stop"() : () -> ()
    %cst_45 = arith.constant dense<0xFF800000> : vector<2x16xf32>
    %103 = vector.multi_reduction <maximumf>, %102, %cst_45 [2] : vector<2x16x16xf32> to vector<2x16xf32>
    %104 = vector.shape_cast %103 : vector<2x16xf32> to vector<2x16x1xf32>
    %105 = vector.broadcast %104 : vector<2x16x1xf32> to vector<2x16x16xf32>
    %106 = arith.subf %102, %105 : vector<2x16x16xf32>
    %107 = math.exp %106 : vector<2x16x16xf32>
    %cst_46 = arith.constant dense<0.000000e+00> : vector<2x16xf32>
    %108 = vector.multi_reduction <add>, %107, %cst_46 [2] : vector<2x16x16xf32> to vector<2x16xf32>
    %109 = vector.shape_cast %108 : vector<2x16xf32> to vector<2x16x1xf32>
    %110 = tpu.reciprocal %109 {approx = true} : vector<2x16x1xf32> -> vector<2x16x1xf32>
    %111 = vector.broadcast %110 : vector<2x16x1xf32> to vector<2x16x16xf32>
    %112 = arith.mulf %107, %111 : vector<2x16x16xf32>
    %113 = arith.truncf %112 : vector<2x16x16xf32> to vector<2x16x16xbf16>
    "tpu.trace_start"() <{level = 10 : i32, message = "bqk,bkd->bqd"}> : () -> ()
    %cst_47 = arith.constant dense<0.000000e+00> : vector<2x16x16xf32>
    %114 = tpu.matmul %113, %101, %cst_47 {dimension_numbers = #tpu.dot_dimension_numbers<[2], [1], [1], [2], [0, 0, 0, 1, 1, 2], [0], [0]>} : vector<2x16x16xbf16>, vector<2x16x16xbf16>, vector<2x16x16xf32> -> vector<2x16x16xf32>
    "tpu.trace_stop"() : () -> ()
    %c0_48 = arith.constant 0 : index
    %c0_49 = arith.constant 0 : index
    %c48 = arith.constant 48 : index
    %115 = vector.load %arg19[%c0_48, %c0_49, %c48] : memref<2x16x64xf32, #tpu.memory_space<vmem>>, vector<2x16x16xf32>
    tpu.vector_store %arg19[%c0_48, %c0_49, %c48], %114 {strides = array<i32>} : memref<2x16x64xf32, #tpu.memory_space<vmem>>, vector<2x16x16xf32>,
    %c0_50 = arith.constant 0 : index
    %c0_51 = arith.constant 0 : index
    %c0_52 = arith.constant 0 : index
    %116 = vector.load %arg19[%c0_50, %c0_51, %c0_52] : memref<2x16x64xf32, #tpu.memory_space<vmem>>, vector<2x16x64xf32>
    %117 = vector.shape_cast %116 : vector<2x16x64xf32> to vector<32x64xf32>
    %118 = arith.truncf %117 : vector<32x64xf32> to vector<32x64xbf16>
    %c0_53 = arith.constant 0 : index
    %c0_54 = arith.constant 0 : index
    %119 = vector.load %arg8[%c0_53, %c0_54] : memref<64x64xbf16, #tpu.memory_space<vmem>>, vector<64x64xbf16>
    %cst_55 = arith.constant dense<0.000000e+00> : vector<32x64xf32>
    %120 = tpu.matmul %118, %119, %cst_55 {dimension_numbers = #tpu.dot_dimension_numbers<[1], [0], [0], [1], [0, 0, 1, 1], [], []>} : vector<32x64xbf16>, vector<64x64xbf16>, vector<32x64xf32> -> vector<32x64xf32>
    %121 = arith.addf %1, %120 : vector<32x64xf32>
    %c0_56 = arith.constant 0 : index
    %c0_57 = arith.constant 0 : index
    %122 = vector.load %arg9[%c0_56, %c0_57] : memref<1x64xf32, #tpu.memory_space<vmem>>, vector<1x64xf32>
    %123 = vector.broadcast %122 : vector<1x64xf32> to vector<32x64xf32>
    %124 = arith.addf %121, %123 : vector<32x64xf32>
    %c0_58 = arith.constant 0 : index
    %c0_59 = arith.constant 0 : index
    %125 = vector.load %arg12[%c0_58, %c0_59] : memref<1x64xf32, #tpu.memory_space<vmem>>, vector<1x64xf32>
    %c0_60 = arith.constant 0 : index
    %c0_61 = arith.constant 0 : index
    %126 = vector.load %arg13[%c0_60, %c0_61] : memref<1x64xf32, #tpu.memory_space<vmem>>, vector<1x64xf32>
    %cst_62 = arith.constant dense<0.000000e+00> : vector<32xf32>
    %127 = vector.multi_reduction <add>, %124, %cst_62 [1] : vector<32x64xf32> to vector<32xf32>
    %128 = vector.shape_cast %127 : vector<32xf32> to vector<32x1xf32>
    %cst_63 = arith.constant 6.400000e+01 : f32
    %129 = vector.broadcast %cst_63 : f32 to vector<32x1xf32>
    %130 = arith.divf %128, %129 : vector<32x1xf32>
    %131 = vector.broadcast %130 : vector<32x1xf32> to vector<32x64xf32>
    %132 = arith.subf %124, %131 : vector<32x64xf32>
    %133 = arith.mulf %132, %132 : vector<32x64xf32>
    %cst_64 = arith.constant dense<0.000000e+00> : vector<32xf32>
    %134 = vector.multi_reduction <add>, %133, %cst_64 [1] : vector<32x64xf32> to vector<32xf32>
    %135 = vector.shape_cast %134 : vector<32xf32> to vector<32x1xf32>
    %cst_65 = arith.constant 6.400000e+01 : f32
    %136 = vector.broadcast %cst_65 : f32 to vector<32x1xf32>
    %137 = arith.divf %135, %136 : vector<32x1xf32>
    %138 = vector.broadcast %130 : vector<32x1xf32> to vector<32x64xf32>
    %139 = arith.subf %124, %138 : vector<32x64xf32>
    %cst_66 = arith.constant 9.99999974E-6 : f32
    %140 = vector.broadcast %cst_66 : f32 to vector<32x1xf32>
    %141 = arith.addf %137, %140 : vector<32x1xf32>
    %142 = math.rsqrt %141 : vector<32x1xf32>
    %143 = vector.broadcast %142 : vector<32x1xf32> to vector<32x64xf32>
    %144 = arith.mulf %139, %143 : vector<32x64xf32>
    %145 = vector.broadcast %125 : vector<1x64xf32> to vector<32x64xf32>
    %146 = arith.mulf %144, %145 : vector<32x64xf32>
    %147 = vector.broadcast %126 : vector<1x64xf32> to vector<32x64xf32>
    %148 = arith.addf %146, %147 : vector<32x64xf32>
    %149 = arith.truncf %148 : vector<32x64xf32> to vector<32x64xbf16>
    %c0_67 = arith.constant 0 : index
    %c0_68 = arith.constant 0 : index
    %150 = vector.load %arg14[%c0_67, %c0_68] : memref<64x256xbf16, #tpu.memory_space<vmem>>, vector<64x256xbf16>
    %cst_69 = arith.constant dense<0.000000e+00> : vector<32x256xf32>
    %151 = tpu.matmul %149, %150, %cst_69 {dimension_numbers = #tpu.dot_dimension_numbers<[1], [0], [0], [1], [0, 0, 1, 1], [], []>} : vector<32x64xbf16>, vector<64x256xbf16>, vector<32x256xf32> -> vector<32x256xf32>
    %c0_70 = arith.constant 0 : index
    %c0_71 = arith.constant 0 : index
    %152 = vector.load %arg15[%c0_70, %c0_71] : memref<1x256xf32, #tpu.memory_space<vmem>>, vector<1x256xf32>
    %153 = vector.broadcast %152 : vector<1x256xf32> to vector<32x256xf32>
    %154 = arith.addf %151, %153 : vector<32x256xf32>
    %cst_72 = arith.constant 1.702000e+00 : f32
    %155 = vector.broadcast %cst_72 : f32 to vector<32x256xf32>
    %156 = arith.mulf %155, %154 : vector<32x256xf32>
    %157 = arith.negf %156 : vector<32x256xf32>
    %158 = math.exp %157 : vector<32x256xf32>
    %cst_73 = arith.constant 1.000000e+00 : f32
    %159 = vector.broadcast %cst_73 : f32 to vector<32x256xf32>
    %160 = arith.addf %159, %158 : vector<32x256xf32>
    %161 = arith.divf %159, %160 : vector<32x256xf32>
    %162 = arith.mulf %154, %161 : vector<32x256xf32>
    %163 = arith.truncf %162 : vector<32x256xf32> to vector<32x256xbf16>
    %c0_74 = arith.constant 0 : index
    %c0_75 = arith.constant 0 : index
    %164 = vector.load %arg16[%c0_74, %c0_75] : memref<256x64xbf16, #tpu.memory_space<vmem>>, vector<256x64xbf16>
    %cst_76 = arith.constant dense<0.000000e+00> : vector<32x64xf32>
    %165 = tpu.matmul %163, %164, %cst_76 {dimension_numbers = #tpu.dot_dimension_numbers<[1], [0], [0], [1], [0, 0, 1, 1], [], []>} : vector<32x256xbf16>, vector<256x64xbf16>, vector<32x64xf32> -> vector<32x64xf32>
    %c0_77 = arith.constant 0 : index
    %c0_78 = arith.constant 0 : index
    %166 = vector.load %arg17[%c0_77, %c0_78] : memref<1x64xf32, #tpu.memory_space<vmem>>, vector<1x64xf32>
    %167 = vector.broadcast %166 : vector<1x64xf32> to vector<32x64xf32>
    %168 = arith.addf %165, %167 : vector<32x64xf32>
    %169 = arith.addf %124, %168 : vector<32x64xf32>
    %170 = vector.shape_cast %169 : vector<32x64xf32> to vector<2x16x64xf32>
    %c0_79 = arith.constant 0 : index
    %c0_80 = arith.constant 0 : index
    %c0_81 = arith.constant 0 : index
    %171 = vector.load %arg18[%c0_79, %c0_80, %c0_81] : memref<2x16x64xf32, #tpu.memory_space<vmem>>, vector<2x16x64xf32>
    tpu.vector_store %arg18[%c0_79, %c0_80, %c0_81], %170 {strides = array<i32>} : memref<2x16x64xf32, #tpu.memory_space<vmem>>, vector<2x16x64xf32>,
    return
  }
  func.func @transform_0(%arg0: i32) -> (i32, i32, i32) {
    %c0_i32 = arith.constant 0 : i32
    %c0_i32_0 = arith.constant 0 : i32
    %c0_i32_1 = arith.constant 0 : i32
    return %arg0, %c0_i32, %c0_i32_0 : i32, i32, i32
  }
  func.func @transform_1(%arg0: i32) -> (i32, i32) {
    %c0_i32 = arith.constant 0 : i32
    %c0_i32_0 = arith.constant 0 : i32
    %c0_i32_1 = arith.constant 0 : i32
    return %c0_i32, %c0_i32_0 : i32, i32
  }
  func.func @transform_2(%arg0: i32) -> (i32, i32) {
    %c0_i32 = arith.constant 0 : i32
    %c0_i32_0 = arith.constant 0 : i32
    %c0_i32_1 = arith.constant 0 : i32
    return %c0_i32, %c0_i32_0 : i32, i32
  }
  func.func @transform_3(%arg0: i32) -> (i32, i32) {
    %c0_i32 = arith.constant 0 : i32
    %c0_i32_0 = arith.constant 0 : i32
    %c0_i32_1 = arith.constant 0 : i32
    return %c0_i32, %c0_i32_0 : i32, i32
  }
  func.func @transform_4(%arg0: i32) -> (i32, i32) {
    %c0_i32 = arith.constant 0 : i32
    %c0_i32_0 = arith.constant 0 : i32
    %c0_i32_1 = arith.constant 0 : i32
    return %c0_i32, %c0_i32_0 : i32, i32
  }
  func.func @transform_5(%arg0: i32) -> (i32, i32) {
    %c0_i32 = arith.constant 0 : i32
    %c0_i32_0 = arith.constant 0 : i32
    %c0_i32_1 = arith.constant 0 : i32
    return %c0_i32, %c0_i32_0 : i32, i32
  }
  func.func @transform_6(%arg0: i32) -> (i32, i32) {
    %c0_i32 = arith.constant 0 : i32
    %c0_i32_0 = arith.constant 0 : i32
    %c0_i32_1 = arith.constant 0 : i32
    return %c0_i32, %c0_i32_0 : i32, i32
  }
  func.func @transform_7(%arg0: i32) -> (i32, i32) {
    %c0_i32 = arith.constant 0 : i32
    %c0_i32_0 = arith.constant 0 : i32
    %c0_i32_1 = arith.constant 0 : i32
    return %c0_i32, %c0_i32_0 : i32, i32
  }
  func.func @transform_8(%arg0: i32) -> (i32, i32) {
    %c0_i32 = arith.constant 0 : i32
    %c0_i32_0 = arith.constant 0 : i32
    %c0_i32_1 = arith.constant 0 : i32
    return %c0_i32, %c0_i32_0 : i32, i32
  }
  func.func @transform_9(%arg0: i32) -> (i32, i32) {
    %c0_i32 = arith.constant 0 : i32
    %c0_i32_0 = arith.constant 0 : i32
    %c0_i32_1 = arith.constant 0 : i32
    return %c0_i32, %c0_i32_0 : i32, i32
  }
  func.func @transform_10(%arg0: i32) -> (i32, i32) {
    %c0_i32 = arith.constant 0 : i32
    %c0_i32_0 = arith.constant 0 : i32
    %c0_i32_1 = arith.constant 0 : i32
    return %c0_i32, %c0_i32_0 : i32, i32
  }
  func.func @transform_11(%arg0: i32) -> (i32, i32) {
    %c0_i32 = arith.constant 0 : i32
    %c0_i32_0 = arith.constant 0 : i32
    %c0_i32_1 = arith.constant 0 : i32
    return %c0_i32, %c0_i32_0 : i32, i32
  }
  func.func @transform_12(%arg0: i32) -> (i32, i32) {
    %c0_i32 = arith.constant 0 : i32
    %c0_i32_0 = arith.constant 0 : i32
    %c0_i32_1 = arith.constant 0 : i32
    return %c0_i32, %c0_i32_0 : i32, i32
  }
  func.func @transform_13(%arg0: i32) -> (i32, i32) {
    %c0_i32 = arith.constant 0 : i32
    %c0_i32_0 = arith.constant 0 : i32
    %c0_i32_1 = arith.constant 0 : i32
    return %c0_i32, %c0_i32_0 : i32, i32
  }
  func.func @transform_14(%arg0: i32) -> (i32, i32) {
    %c0_i32 = arith.constant 0 : i32
    %c0_i32_0 = arith.constant 0 : i32
    %c0_i32_1 = arith.constant 0 : i32
    return %c0_i32, %c0_i32_0 : i32, i32
  }
  func.func @transform_15(%arg0: i32) -> (i32, i32) {
    %c0_i32 = arith.constant 0 : i32
    %c0_i32_0 = arith.constant 0 : i32
    %c0_i32_1 = arith.constant 0 : i32
    return %c0_i32, %c0_i32_0 : i32, i32
  }
  func.func @transform_16(%arg0: i32) -> (i32, i32) {
    %c0_i32 = arith.constant 0 : i32
    %c0_i32_0 = arith.constant 0 : i32
    %c0_i32_1 = arith.constant 0 : i32
    return %c0_i32, %c0_i32_0 : i32, i32
  }
  func.func @transform_17(%arg0: i32) -> (i32, i32, i32) {
    %c0_i32 = arith.constant 0 : i32
    %c0_i32_0 = arith.constant 0 : i32
    %c0_i32_1 = arith.constant 0 : i32
    return %arg0, %c0_i32, %c0_i32_0 : i32, i32, i32
  }
}

</mosaic_0001>

<llo_original>
// kernel: tpu_custom_call.1
$region0: #{tpu_custom_call.1}
  #allocation0 [shape = 'u32[]', space=smem, size = 0x4, offset = 0x4, fixed_abs, tag = 'smem constant byte address 0x4 - core index']
  #allocation1 [shape = 'u32[144,128]{1,0:T(1,128)}', space=vmem, size = 0x12000, scoped, tag = 'internal scratch']
  #allocation2 [shape = 'f32[2,16,64]{2,1,0:T(8,128)}', space=vmem, size = 0x4000, scoped, tag = 'scratch operand']
  %s0 = inlined_call_operand.vmem [shape: f32[4,16,64], index: 0, kind: input, shape index: {}]
  %s1 = inlined_call_operand.vmem [shape: bf16[64,64], index: 1, kind: input, shape index: {}]
  %s2 = inlined_call_operand.vmem [shape: bf16[64,64], index: 2, kind: input, shape index: {}]
  %s3 = inlined_call_operand.hbm [shape: bf16[64,64], index: 3, kind: input, shape index: {}]
  %s4 = inlined_call_operand.vmem [shape: f32[1,64], index: 4, kind: input, shape index: {}]
  %s5 = inlined_call_operand.vmem [shape: f32[1,64], index: 5, kind: input, shape index: {}]
  %s6 = inlined_call_operand.vmem [shape: f32[1,64], index: 6, kind: input, shape index: {}]
  %s7 = inlined_call_operand.hbm [shape: bf16[64,64], index: 7, kind: input, shape index: {}]
  %s8 = inlined_call_operand.vmem [shape: f32[1,64], index: 8, kind: input, shape index: {}]
  %s9 = inlined_call_operand.vmem [shape: f32[1,64], index: 9, kind: input, shape index: {}]
  %s10 = inlined_call_operand.vmem [shape: f32[1,64], index: 10, kind: input, shape index: {}]
  %s11 = inlined_call_operand.vmem [shape: f32[1,64], index: 11, kind: input, shape index: {}]
  %s12 = inlined_call_operand.vmem [shape: f32[1,64], index: 12, kind: input, shape index: {}]
  %s13 = inlined_call_operand.vmem [shape: bf16[64,256], index: 13, kind: input, shape index: {}]
  %s14 = inlined_call_operand.vmem [shape: f32[1,256], index: 14, kind: input, shape index: {}]
  %s15 = inlined_call_operand.vmem [shape: bf16[256,64], index: 15, kind: input, shape index: {}]
  %s16 = inlined_call_operand.vmem [shape: f32[1,64], index: 16, kind: input, shape index: {}]
  %s17 = inlined_call_operand.hbm [shape: f32[4,16,64], index: 17, kind: output, shape index: {}]
  %s18 = sld [smem:[#allocation0]]
  $region109: #{tpu_custom_call.1} parent=0
    _
  %s20 = ssub.s32 1, %s18
  %s21 = scalar_select 0, %s20, %s18
  $region1: #{tpu_custom_call.1} parent=0
    #allocation3 [shape = 'u8[16384]{0}', space=vmem, size = 0x4000, scoped, tag = 'input window, operand 3, single buffered']
    #allocation4 [shape = 's32[2]{0}', space=sflag, size = 0x8, scoped, tag = 'scoped memory for tpu_custom_call.1']
    #allocation5 [shape = 's32[2]{0}', space=sflag, size = 0x8, scoped, tag = 'scoped memory for tpu_custom_call.1']
    #allocation6 [shape = 'u8[16384]{0}', space=vmem, size = 0x4000, scoped, tag = 'input window, operand 7, single buffered']
    #allocation7 [shape = 's32[1]{0}', space=sflag, size = 0x4, scoped, tag = 'scoped memory for tpu_custom_call.1']
    #allocation8 [shape = 'u8[32768]{0}', space=vmem, size = 0x8000, scoped, tag = 'output window, operand 0']
    %22 = vsyncpa [#allocation4], 0
    %23 = vsyncpa [#allocation7], 0
    %24 = vsyncpa [#allocation5], 0
    %s25 = scalar_lea.sflag [#allocation5], 1
    %26 = vsyncpa %s25, 0
    loop: start=0, step=1, limit=4
    $region2: #{tpu_custom_call.1} parent=1 // loop_pre_header
      _
    $region3: #{tpu_custom_call.1} parent=1 // loop_header
      %s28 = sphi 0, %s32
      %p29 = scmp.ge.s32.totalorder %s28, 4
      %s38 = sphi 0, %s40
      %s41 = sphi 0, %s38
      %s42 = sphi 0, %s41
      %s58 = sphi 0, %s42
      %s62 = sphi 0, %s62
      %s64 = sphi 0, %s62
      %s65 = sphi 0, %s64
      %s79 = sphi 0, %s65
      %s83 = sphi 0, %s83
      %s85 = sphi 0, %s83
      %s86 = sphi 0, %s85
      %s100 = sphi 0, %s86
      %s104 = sphi 0, %s104
      %s106 = sphi 0, %s104
      %s107 = sphi 0, %s106
      %s121 = sphi 0, %s107
      %s125 = sphi 0, %s125
      %s127 = sphi 0, %s125
      %s128 = sphi 0, %s127
      %s142 = sphi 0, %s128
      %s146 = sphi 0, %s146
      %s148 = sphi 0, %s146
      %s149 = sphi 0, %s148
      %s163 = sphi 0, %s149
      %s167 = sphi 0, %s167
      %s169 = sphi 0, %s167
      %s170 = sphi 0, %s169
      %s184 = sphi 0, %s170
      %s188 = sphi 0, %s188
      %s190 = sphi 0, %s188
      %s191 = sphi 0, %s190
      %s205 = sphi 0, %s191
      %s209 = sphi 0, %s209
      %s211 = sphi 0, %s209
      %s212 = sphi 0, %s211
      %s226 = sphi 0, %s212
      %s230 = sphi 0, %s230
      %s232 = sphi 0, %s230
      %s233 = sphi 0, %s232
      %s247 = sphi 0, %s233
      %s251 = sphi 0, %s251
      %s253 = sphi 0, %s251
      %s254 = sphi 0, %s253
      %s268 = sphi 0, %s254
      %s272 = sphi 0, %s272
      %s274 = sphi 0, %s272
      %s275 = sphi 0, %s274
      %s289 = sphi 0, %s275
      %s293 = sphi 0, %s293
      %s295 = sphi 0, %s293
      %s296 = sphi 0, %s295
      %s310 = sphi 0, %s296
      %s314 = sphi 0, %s314
      %s316 = sphi 0, %s314
      %s317 = sphi 0, %s316
      %s331 = sphi 0, %s317
      %s335 = sphi 0, %s335
      %s337 = sphi 0, %s335
      %s338 = sphi 0, %s337
      %s352 = sphi 0, %s338
      %s356 = sphi 0, %s356
      %s358 = sphi 0, %s356
      %s359 = sphi 0, %s358
      %s373 = sphi 0, %s359
      %s377 = sphi 0, %s377
      %s379 = sphi 0, %s377
      %s380 = sphi 0, %s379
      %s394 = sphi 0, %s380
      %s400 = sphi 0, %s402
      %s403 = sphi 0, %s400
      %s404 = sphi 0, %s403
      %s420 = sphi 0, %s404
    $region4: #{tpu_custom_call.1} parent=1 // loop_header_branch
      %31 = sbr.rel (%p29) target = $region8
    $region5: #{tpu_custom_call.1} parent=1 // loop_body
      %s33 = ssub.s32 %s28, 1
      %s34 = ssub.s32 %s28, 2
      %s35 = sadd.s32 %s28, 1
      %s36 = ssub.s32 %s28, %s35
      %p37 = scmp.eq.s32.totalorder %s36, 0
      %s39 = sadd.s32 %s38, 1
      %s40 = scalar_select %p37, %s38, %s39
      %p43 = pneg %p37
      %p44 = scmp.eq.s32.totalorder %s28, 1
      %p45 = por %p43, %p44
      %p46 = scmp.ne.s32.totalorder %s38, %s41
      %p47 = scmp.eq.s32.totalorder %s28, 0
      %p48 = por %p46, %p47
      %p49 = scmp.ne.s32.totalorder %s38, %s41
      %p50 = scmp.eq.s32.totalorder %s33, 1
      %p51 = por %p49, %p50
      %p52 = scmp.ne.s32.totalorder %s41, %s42
      %p53 = scmp.eq.s32.totalorder %s33, 0
      %p54 = por %p52, %p53
      %p55 = scmp.ne.s32.totalorder %s41, %s42
      %p56 = scmp.eq.s32.totalorder %s34, 1
      %p57 = por %p55, %p56
      %p59 = scmp.ne.s32.totalorder %s42, %s58
      %p60 = scmp.eq.s32.totalorder %s34, 0
      %p61 = por %p59, %p60
      %s63 = sadd.s32 %s62, 1
      %p66 = scmp.eq.s32.totalorder %s28, 1
      %p67 = scmp.ne.s32.totalorder %s62, %s64
      %p68 = scmp.eq.s32.totalorder %s28, 0
      %p69 = por %p67, %p68
      %p70 = scmp.ne.s32.totalorder %s62, %s64
      %p71 = scmp.eq.s32.totalorder %s33, 1
      %p72 = por %p70, %p71
      %p73 = scmp.ne.s32.totalorder %s64, %s65
      %p74 = scmp.eq.s32.totalorder %s33, 0
      %p75 = por %p73, %p74
      %p76 = scmp.ne.s32.totalorder %s64, %s65
      %p77 = scmp.eq.s32.totalorder %s34, 1
      %p78 = por %p76, %p77
      %p80 = scmp.ne.s32.totalorder %s65, %s79
      %p81 = scmp.eq.s32.totalorder %s34, 0
      %p82 = por %p80, %p81
      %s84 = sadd.s32 %s83, 1
      %p87 = scmp.eq.s32.totalorder %s28, 1
      %p88 = scmp.ne.s32.totalorder %s83, %s85
      %p89 = scmp.eq.s32.totalorder %s28, 0
      %p90 = por %p88, %p89
      %p91 = scmp.ne.s32.totalorder %s83, %s85
      %p92 = scmp.eq.s32.totalorder %s33, 1
      %p93 = por %p91, %p92
      %p94 = scmp.ne.s32.totalorder %s85, %s86
      %p95 = scmp.eq.s32.totalorder %s33, 0
      %p96 = por %p94, %p95
      %p97 = scmp.ne.s32.totalorder %s85, %s86
      %p98 = scmp.eq.s32.totalorder %s34, 1
      %p99 = por %p97, %p98
      %p101 = scmp.ne.s32.totalorder %s86, %s100
      %p102 = scmp.eq.s32.totalorder %s34, 0
      %p103 = por %p101, %p102
      %s105 = sadd.s32 %s104, 1
      %p108 = scmp.eq.s32.totalorder %s28, 1
      %p109 = scmp.ne.s32.totalorder %s104, %s106
      %p110 = scmp.eq.s32.totalorder %s28, 0
      %p111 = por %p109, %p110
      %p112 = scmp.ne.s32.totalorder %s104, %s106
      %p113 = scmp.eq.s32.totalorder %s33, 1
      %p114 = por %p112, %p113
      %p115 = scmp.ne.s32.totalorder %s106, %s107
      %p116 = scmp.eq.s32.totalorder %s33, 0
      %p117 = por %p115, %p116
      %p118 = scmp.ne.s32.totalorder %s106, %s107
      %p119 = scmp.eq.s32.totalorder %s34, 1
      %p120 = por %p118, %p119
      %p122 = scmp.ne.s32.totalorder %s107, %s121
      %p123 = scmp.eq.s32.totalorder %s34, 0
      %p124 = por %p122, %p123
      %s126 = sadd.s32 %s125, 1
      %p129 = scmp.eq.s32.totalorder %s28, 1
      %p130 = scmp.ne.s32.totalorder %s125, %s127
      %p131 = scmp.eq.s32.totalorder %s28, 0
      %p132 = por %p130, %p131
      %p133 = scmp.ne.s32.totalorder %s125, %s127
      %p134 = scmp.eq.s32.totalorder %s33, 1
      %p135 = por %p133, %p134
      %p136 = scmp.ne.s32.totalorder %s127, %s128
      %p137 = scmp.eq.s32.totalorder %s33, 0
      %p138 = por %p136, %p137
      %p139 = scmp.ne.s32.totalorder %s127, %s128
      %p140 = scmp.eq.s32.totalorder %s34, 1
      %p141 = por %p139, %p140
      %p143 = scmp.ne.s32.totalorder %s128, %s142
      %p144 = scmp.eq.s32.totalorder %s34, 0
      %p145 = por %p143, %p144
      %s147 = sadd.s32 %s146, 1
      %p150 = scmp.eq.s32.totalorder %s28, 1
      %p151 = scmp.ne.s32.totalorder %s146, %s148
      %p152 = scmp.eq.s32.totalorder %s28, 0
      %p153 = por %p151, %p152
      %p154 = scmp.ne.s32.totalorder %s146, %s148
      %p155 = scmp.eq.s32.totalorder %s33, 1
      %p156 = por %p154, %p155
      %p157 = scmp.ne.s32.totalorder %s148, %s149
      %p158 = scmp.eq.s32.totalorder %s33, 0
      %p159 = por %p157, %p158
      %p160 = scmp.ne.s32.totalorder %s148, %s149
      %p161 = scmp.eq.s32.totalorder %s34, 1
      %p162 = por %p160, %p161
      %p164 = scmp.ne.s32.totalorder %s149, %s163
      %p165 = scmp.eq.s32.totalorder %s34, 0
      %p166 = por %p164, %p165
      %s168 = sadd.s32 %s167, 1
      %p171 = scmp.eq.s32.totalorder %s28, 1
      %p172 = scmp.ne.s32.totalorder %s167, %s169
      %p173 = scmp.eq.s32.totalorder %s28, 0
      %p174 = por %p172, %p173
      %p175 = scmp.ne.s32.totalorder %s167, %s169
      %p176 = scmp.eq.s32.totalorder %s33, 1
      %p177 = por %p175, %p176
      %p178 = scmp.ne.s32.totalorder %s169, %s170
      %p179 = scmp.eq.s32.totalorder %s33, 0
      %p180 = por %p178, %p179
      %p181 = scmp.ne.s32.totalorder %s169, %s170
      %p182 = scmp.eq.s32.totalorder %s34, 1
      %p183 = por %p181, %p182
      %p185 = scmp.ne.s32.totalorder %s170, %s184
      %p186 = scmp.eq.s32.totalorder %s34, 0
      %p187 = por %p185, %p186
      %s189 = sadd.s32 %s188, 1
      %p192 = scmp.eq.s32.totalorder %s28, 1
      %p193 = scmp.ne.s32.totalorder %s188, %s190
      %p194 = scmp.eq.s32.totalorder %s28, 0
      %p195 = por %p193, %p194
      %p196 = scmp.ne.s32.totalorder %s188, %s190
      %p197 = scmp.eq.s32.totalorder %s33, 1
      %p198 = por %p196, %p197
      %p199 = scmp.ne.s32.totalorder %s190, %s191
      %p200 = scmp.eq.s32.totalorder %s33, 0
      %p201 = por %p199, %p200
      %p202 = scmp.ne.s32.totalorder %s190, %s191
      %p203 = scmp.eq.s32.totalorder %s34, 1
      %p204 = por %p202, %p203
      %p206 = scmp.ne.s32.totalorder %s191, %s205
      %p207 = scmp.eq.s32.totalorder %s34, 0
      %p208 = por %p206, %p207
      %s210 = sadd.s32 %s209, 1
      %p213 = scmp.eq.s32.totalorder %s28, 1
      %p214 = scmp.ne.s32.totalorder %s209, %s211
      %p215 = scmp.eq.s32.totalorder %s28, 0
      %p216 = por %p214, %p215
      %p217 = scmp.ne.s32.totalorder %s209, %s211
      %p218 = scmp.eq.s32.totalorder %s33, 1
      %p219 = por %p217, %p218
      %p220 = scmp.ne.s32.totalorder %s211, %s212
      %p221 = scmp.eq.s32.totalorder %s33, 0
      %p222 = por %p220, %p221
      %p223 = scmp.ne.s32.totalorder %s211, %s212
      %p224 = scmp.eq.s32.totalorder %s34, 1
      %p225 = por %p223, %p224
      %p227 = scmp.ne.s32.totalorder %s212, %s226
      %p228 = scmp.eq.s32.totalorder %s34, 0
      %p229 = por %p227, %p228
      %s231 = sadd.s32 %s230, 1
      %p234 = scmp.eq.s32.totalorder %s28, 1
      %p235 = scmp.ne.s32.totalorder %s230, %s232
      %p236 = scmp.eq.s32.totalorder %s28, 0
      %p237 = por %p235, %p236
      %p238 = scmp.ne.s32.totalorder %s230, %s232
      %p239 = scmp.eq.s32.totalorder %s33, 1
      %p240 = por %p238, %p239
      %p241 = scmp.ne.s32.totalorder %s232, %s233
      %p242 = scmp.eq.s32.totalorder %s33, 0
      %p243 = por %p241, %p242
      %p244 = scmp.ne.s32.totalorder %s232, %s233
      %p245 = scmp.eq.s32.totalorder %s34, 1
      %p246 = por %p244, %p245
      %p248 = scmp.ne.s32.totalorder %s233, %s247
      %p249 = scmp.eq.s32.totalorder %s34, 0
      %p250 = por %p248, %p249
      %s252 = sadd.s32 %s251, 1
      %p255 = scmp.eq.s32.totalorder %s28, 1
      %p256 = scmp.ne.s32.totalorder %s251, %s253
      %p257 = scmp.eq.s32.totalorder %s28, 0
      %p258 = por %p256, %p257
      %p259 = scmp.ne.s32.totalorder %s251, %s253
      %p260 = scmp.eq.s32.totalorder %s33, 1
      %p261 = por %p259, %p260
      %p262 = scmp.ne.s32.totalorder %s253, %s254
      %p263 = scmp.eq.s32.totalorder %s33, 0
      %p264 = por %p262, %p263
      %p265 = scmp.ne.s32.totalorder %s253, %s254
      %p266 = scmp.eq.s32.totalorder %s34, 1
      %p267 = por %p265, %p266
      %p269 = scmp.ne.s32.totalorder %s254, %s268
      %p270 = scmp.eq.s32.totalorder %s34, 0
      %p271 = por %p269, %p270
      %s273 = sadd.s32 %s272, 1
      %p276 = scmp.eq.s32.totalorder %s28, 1
      %p277 = scmp.ne.s32.totalorder %s272, %s274
      %p278 = scmp.eq.s32.totalorder %s28, 0
      %p279 = por %p277, %p278
      %p280 = scmp.ne.s32.totalorder %s272, %s274
      %p281 = scmp.eq.s32.totalorder %s33, 1
      %p282 = por %p280, %p281
      %p283 = scmp.ne.s32.totalorder %s274, %s275
      %p284 = scmp.eq.s32.totalorder %s33, 0
      %p285 = por %p283, %p284
      %p286 = scmp.ne.s32.totalorder %s274, %s275
      %p287 = scmp.eq.s32.totalorder %s34, 1
      %p288 = por %p286, %p287
      %p290 = scmp.ne.s32.totalorder %s275, %s289
      %p291 = scmp.eq.s32.totalorder %s34, 0
      %p292 = por %p290, %p291
      %s294 = sadd.s32 %s293, 1
      %p297 = scmp.eq.s32.totalorder %s28, 1
      %p298 = scmp.ne.s32.totalorder %s293, %s295
      %p299 = scmp.eq.s32.totalorder %s28, 0
      %p300 = por %p298, %p299
      %p301 = scmp.ne.s32.totalorder %s293, %s295
      %p302 = scmp.eq.s32.totalorder %s33, 1
      %p303 = por %p301, %p302
      %p304 = scmp.ne.s32.totalorder %s295, %s296
      %p305 = scmp.eq.s32.totalorder %s33, 0
      %p306 = por %p304, %p305
      %p307 = scmp.ne.s32.totalorder %s295, %s296
      %p308 = scmp.eq.s32.totalorder %s34, 1
      %p309 = por %p307, %p308
      %p311 = scmp.ne.s32.totalorder %s296, %s310
      %p312 = scmp.eq.s32.totalorder %s34, 0
      %p313 = por %p311, %p312
      %s315 = sadd.s32 %s314, 1
      %p318 = scmp.eq.s32.totalorder %s28, 1
      %p319 = scmp.ne.s32.totalorder %s314, %s316
      %p320 = scmp.eq.s32.totalorder %s28, 0
      %p321 = por %p319, %p320
      %p322 = scmp.ne.s32.totalorder %s314, %s316
      %p323 = scmp.eq.s32.totalorder %s33, 1
      %p324 = por %p322, %p323
      %p325 = scmp.ne.s32.totalorder %s316, %s317
      %p326 = scmp.eq.s32.totalorder %s33, 0
      %p327 = por %p325, %p326
      %p328 = scmp.ne.s32.totalorder %s316, %s317
      %p329 = scmp.eq.s32.totalorder %s34, 1
      %p330 = por %p328, %p329
      %p332 = scmp.ne.s32.totalorder %s317, %s331
      %p333 = scmp.eq.s32.totalorder %s34, 0
      %p334 = por %p332, %p333
      %s336 = sadd.s32 %s335, 1
      %p339 = scmp.eq.s32.totalorder %s28, 1
      %p340 = scmp.ne.s32.totalorder %s335, %s337
      %p341 = scmp.eq.s32.totalorder %s28, 0
      %p342 = por %p340, %p341
      %p343 = scmp.ne.s32.totalorder %s335, %s337
      %p344 = scmp.eq.s32.totalorder %s33, 1
      %p345 = por %p343, %p344
      %p346 = scmp.ne.s32.totalorder %s337, %s338
      %p347 = scmp.eq.s32.totalorder %s33, 0
      %p348 = por %p346, %p347
      %p349 = scmp.ne.s32.totalorder %s337, %s338
      %p350 = scmp.eq.s32.totalorder %s34, 1
      %p351 = por %p349, %p350
      %p353 = scmp.ne.s32.totalorder %s338, %s352
      %p354 = scmp.eq.s32.totalorder %s34, 0
      %p355 = por %p353, %p354
      %s357 = sadd.s32 %s356, 1
      %p360 = scmp.eq.s32.totalorder %s28, 1
      %p361 = scmp.ne.s32.totalorder %s356, %s358
      %p362 = scmp.eq.s32.totalorder %s28, 0
      %p363 = por %p361, %p362
      %p364 = scmp.ne.s32.totalorder %s356, %s358
      %p365 = scmp.eq.s32.totalorder %s33, 1
      %p366 = por %p364, %p365
      %p367 = scmp.ne.s32.totalorder %s358, %s359
      %p368 = scmp.eq.s32.totalorder %s33, 0
      %p369 = por %p367, %p368
      %p370 = scmp.ne.s32.totalorder %s358, %s359
      %p371 = scmp.eq.s32.totalorder %s34, 1
      %p372 = por %p370, %p371
      %p374 = scmp.ne.s32.totalorder %s359, %s373
      %p375 = scmp.eq.s32.totalorder %s34, 0
      %p376 = por %p374, %p375
      %s378 = sadd.s32 %s377, 1
      %p381 = scmp.eq.s32.totalorder %s28, 1
      %p382 = scmp.ne.s32.totalorder %s377, %s379
      %p383 = scmp.eq.s32.totalorder %s28, 0
      %p384 = por %p382, %p383
      %p385 = scmp.ne.s32.totalorder %s377, %s379
      %p386 = scmp.eq.s32.totalorder %s33, 1
      %p387 = por %p385, %p386
      %p388 = scmp.ne.s32.totalorder %s379, %s380
      %p389 = scmp.eq.s32.totalorder %s33, 0
      %p390 = por %p388, %p389
      %p391 = scmp.ne.s32.totalorder %s379, %s380
      %p392 = scmp.eq.s32.totalorder %s34, 1
      %p393 = por %p391, %p392
      %p395 = scmp.ne.s32.totalorder %s380, %s394
      %p396 = scmp.eq.s32.totalorder %s34, 0
      %p397 = por %p395, %p396
      %s398 = ssub.s32 %s28, %s35
      %p399 = scmp.eq.s32.totalorder %s398, 0
      %s401 = sadd.s32 %s400, 1
      %s402 = scalar_select %p399, %s400, %s401
      %p405 = pneg %p399
      %p406 = scmp.eq.s32.totalorder %s28, 1
      %p407 = por %p405, %p406
      %p408 = scmp.ne.s32.totalorder %s400, %s403
      %p409 = scmp.eq.s32.totalorder %s28, 0
      %p410 = por %p408, %p409
      %p411 = scmp.ne.s32.totalorder %s400, %s403
      %p412 = scmp.eq.s32.totalorder %s33, 1
      %p413 = por %p411, %p412
      %p414 = scmp.ne.s32.totalorder %s403, %s404
      %p415 = scmp.eq.s32.totalorder %s33, 0
      %p416 = por %p414, %p415
      %p417 = scmp.ne.s32.totalorder %s403, %s404
      %p418 = scmp.eq.s32.totalorder %s34, 1
      %p419 = por %p417, %p418
      %p421 = scmp.ne.s32.totalorder %s404, %s420
      %p422 = scmp.eq.s32.totalorder %s34, 0
      %p423 = por %p421, %p422
      %p424 = scmp.le.s32.totalorder 1, %s28
      %p425 = scmp.lt.s32.totalorder %s28, 3
      %p426 = pnand %p424, %p425
      %p427 = pneg %p426
      // Predicated region
      $region9: #{tpu_custom_call.1} parent=5 // pred_check
        _
      $region10: #{tpu_custom_call.1} parent=5 // pred_check_branch
        %429 = sbr.rel (%p426) target = $region12
      $region11: #{tpu_custom_call.1} parent=5 // pred_region
        %s430 = ssub.s32 %s28, 1
        // Predicated region
        $region13: #{tpu_custom_call.1} parent=11 // pred_check
          %p431 = pneg %p75
        $region14: #{tpu_custom_call.1} parent=11 // pred_check_branch
          %433 = sbr.rel (%p431) target = $region16
        $region15: #{tpu_custom_call.1} parent=11 // pred_region
          _
        $region16: #{tpu_custom_call.1} parent=11 // pred_fallthru
          _
        // Predicated region
        $region17: #{tpu_custom_call.1} parent=11 // pred_check
          %p434 = pneg %p96
        $region18: #{tpu_custom_call.1} parent=11 // pred_check_branch
          %436 = sbr.rel (%p434) target = $region20
        $region19: #{tpu_custom_call.1} parent=11 // pred_region
          _
        $region20: #{tpu_custom_call.1} parent=11 // pred_fallthru
          _
        // Predicated region
        $region21: #{tpu_custom_call.1} parent=11 // pred_check
          %p437 = pneg %p117
        $region22: #{tpu_custom_call.1} parent=11 // pred_check_branch
          %439 = sbr.rel (%p437) target = $region24
        $region23: #{tpu_custom_call.1} parent=11 // pred_region
          %s441 = ssub.s32 512, 512
          %442 = vsyncadd [#allocation4], %s441
          %s443 = sshll.u32 [#allocation3], 4
          %s444 = int_to_ptr.vmem [resolvable:$true] %s443
          %449 = dma.hbm_to_vmem [thread:$0]  %s3, 512, %s444, [#allocation4], 64, 64, 4
        $region24: #{tpu_custom_call.1} parent=11 // pred_fallthru
          _
        // Predicated region
        $region25: #{tpu_custom_call.1} parent=11 // pred_check
          %p450 = pneg %p138
        $region26: #{tpu_custom_call.1} parent=11 // pred_check_branch
          %452 = sbr.rel (%p450) target = $region28
        $region27: #{tpu_custom_call.1} parent=11 // pred_region
          _
        $region28: #{tpu_custom_call.1} parent=11 // pred_fallthru
          _
        // Predicated region
        $region29: #{tpu_custom_call.1} parent=11 // pred_check
          %p453 = pneg %p159
        $region30: #{tpu_custom_call.1} parent=11 // pred_check_branch
          %455 = sbr.rel (%p453) target = $region32
        $region31: #{tpu_custom_call.1} parent=11 // pred_region
          _
        $region32: #{tpu_custom_call.1} parent=11 // pred_fallthru
          _
        // Predicated region
        $region33: #{tpu_custom_call.1} parent=11 // pred_check
          %p456 = pneg %p180
        $region34: #{tpu_custom_call.1} parent=11 // pred_check_branch
          %458 = sbr.rel (%p456) target = $region36
        $region35: #{tpu_custom_call.1} parent=11 // pred_region
          _
        $region36: #{tpu_custom_call.1} parent=11 // pred_fallthru
          _
        // Predicated region
        $region37: #{tpu_custom_call.1} parent=11 // pred_check
          %p459 = pneg %p201
        $region38: #{tpu_custom_call.1} parent=11 // pred_check_branch
          %461 = sbr.rel (%p459) target = $region40
        $region39: #{tpu_custom_call.1} parent=11 // pred_region
          %s463 = ssub.s32 512, 512
          %464 = vsyncadd [#allocation7], %s463
          %s465 = sshll.u32 [#allocation6], 4
          %s466 = int_to_ptr.vmem [resolvable:$true] %s465
          %471 = dma.hbm_to_vmem [thread:$0]  %s7, 512, %s466, [#allocation7], 64, 64, 4
        $region40: #{tpu_custom_call.1} parent=11 // pred_fallthru
          _
        // Predicated region
        $region41: #{tpu_custom_call.1} parent=11 // pred_check
          %p472 = pneg %p222
        $region42: #{tpu_custom_call.1} parent=11 // pred_check_branch
          %474 = sbr.rel (%p472) target = $region44
        $region43: #{tpu_custom_call.1} parent=11 // pred_region
          _
        $region44: #{tpu_custom_call.1} parent=11 // pred_fallthru
          _
        // Predicated region
        $region45: #{tpu_custom_call.1} parent=11 // pred_check
          %p475 = pneg %p243
        $region46: #{tpu_custom_call.1} parent=11 // pred_check_branch
          %477 = sbr.rel (%p475) target = $region48
        $region47: #{tpu_custom_call.1} parent=11 // pred_region
          _
        $region48: #{tpu_custom_call.1} parent=11 // pred_fallthru
          _
        // Predicated region
        $region49: #{tpu_custom_call.1} parent=11 // pred_check
          %p478 = pneg %p264
        $region50: #{tpu_custom_call.1} parent=11 // pred_check_branch
          %480 = sbr.rel (%p478) target = $region52
        $region51: #{tpu_custom_call.1} parent=11 // pred_region
          _
        $region52: #{tpu_custom_call.1} parent=11 // pred_fallthru
          _
        // Predicated region
        $region53: #{tpu_custom_call.1} parent=11 // pred_check
          %p481 = pneg %p285
        $region54: #{tpu_custom_call.1} parent=11 // pred_check_branch
          %483 = sbr.rel (%p481) target = $region56
        $region55: #{tpu_custom_call.1} parent=11 // pred_region
          _
        $region56: #{tpu_custom_call.1} parent=11 // pred_fallthru
          _
        // Predicated region
        $region57: #{tpu_custom_call.1} parent=11 // pred_check
          %p484 = pneg %p306
        $region58: #{tpu_custom_call.1} parent=11 // pred_check_branch
          %486 = sbr.rel (%p484) target = $region60
        $region59: #{tpu_custom_call.1} parent=11 // pred_region
          _
        $region60: #{tpu_custom_call.1} parent=11 // pred_fallthru
          _
        // Predicated region
        $region61: #{tpu_custom_call.1} parent=11 // pred_check
          %p487 = pneg %p327
        $region62: #{tpu_custom_call.1} parent=11 // pred_check_branch
          %489 = sbr.rel (%p487) target = $region64
        $region63: #{tpu_custom_call.1} parent=11 // pred_region
          _
        $region64: #{tpu_custom_call.1} parent=11 // pred_fallthru
          _
        // Predicated region
        $region65: #{tpu_custom_call.1} parent=11 // pred_check
          %p490 = pneg %p348
        $region66: #{tpu_custom_call.1} parent=11 // pred_check_branch
          %492 = sbr.rel (%p490) target = $region68
        $region67: #{tpu_custom_call.1} parent=11 // pred_region
          _
        $region68: #{tpu_custom_call.1} parent=11 // pred_fallthru
          _
        // Predicated region
        $region69: #{tpu_custom_call.1} parent=11 // pred_check
          %p493 = pneg %p369
        $region70: #{tpu_custom_call.1} parent=11 // pred_check_branch
          %495 = sbr.rel (%p493) target = $region72
        $region71: #{tpu_custom_call.1} parent=11 // pred_region
          _
        $region72: #{tpu_custom_call.1} parent=11 // pred_fallthru
          _
        // Predicated region
        $region73: #{tpu_custom_call.1} parent=11 // pred_check
          %p496 = pneg %p390
        $region74: #{tpu_custom_call.1} parent=11 // pred_check_branch
          %498 = sbr.rel (%p496) target = $region76
        $region75: #{tpu_custom_call.1} parent=11 // pred_region
          _
        $region76: #{tpu_custom_call.1} parent=11 // pred_fallthru
          _
      $region12: #{tpu_custom_call.1} parent=5 // pred_fallthru
        _
      %p499 = scmp.lt.s32.totalorder %s28, 2
      // Predicated region
      $region77: #{tpu_custom_call.1} parent=5 // pred_check
        %p500 = pneg %p499
      $region78: #{tpu_custom_call.1} parent=5 // pred_check_branch
        %502 = sbr.rel (%p500) target = $region80
      $region79: #{tpu_custom_call.1} parent=5 // pred_region
        // Predicated region
        $region81: #{tpu_custom_call.1} parent=79 // pred_check
          %p503 = pneg %p48
        $region82: #{tpu_custom_call.1} parent=79 // pred_check_branch
          %505 = sbr.rel (%p503) target = $region84
        $region83: #{tpu_custom_call.1} parent=79 // pred_region
          %s506 = smul.u32 2, %s28
          %p507 = scmp.lt.s32.totalorder %s506, 3
          %s508 = scalar_select %p507, %s506, 3
          %s509 = smul.addr %s508, 2
          %s510 = smul.addr %s509, 8
          %s511 = scalar_lea.vmem %s0, %s510
          %s512 = smul.u32 2, %s28
        $region84: #{tpu_custom_call.1} parent=79 // pred_fallthru
          _
      $region80: #{tpu_custom_call.1} parent=5 // pred_fallthru
        _
      %p513 = scmp.le.s32.totalorder 1, %s28
      %p514 = scmp.lt.s32.totalorder %s28, 3
      %p515 = pnand %p513, %p514
      %p516 = pneg %p515
      // Predicated region
      $region85: #{tpu_custom_call.1} parent=5 // pred_check
        _
      $region86: #{tpu_custom_call.1} parent=5 // pred_check_branch
        %518 = sbr.rel (%p515) target = $region88
      $region87: #{tpu_custom_call.1} parent=5 // pred_region
        %s519 = ssub.s32 %s28, 1
        // Predicated region
        $region89: #{tpu_custom_call.1} parent=87 // pred_check
          %p520 = pneg %p117
        $region90: #{tpu_custom_call.1} parent=87 // pred_check_branch
          %522 = sbr.rel (%p520) target = $region92
        $region91: #{tpu_custom_call.1} parent=87 // pred_region
          %523 = dma.done [#allocation4], 512
        $region92: #{tpu_custom_call.1} parent=87 // pred_fallthru
          _
        // Predicated region
        $region93: #{tpu_custom_call.1} parent=87 // pred_check
          %p524 = pneg %p201
        $region94: #{tpu_custom_call.1} parent=87 // pred_check_branch
          %526 = sbr.rel (%p524) target = $region96
        $region95: #{tpu_custom_call.1} parent=87 // pred_region
          %527 = dma.done [#allocation7], 512
        $region96: #{tpu_custom_call.1} parent=87 // pred_fallthru
          _
        %s528 = smul.u32 2, %s33
        %p529 = scmp.lt.s32.totalorder %s528, 3
        %s530 = scalar_select %p529, %s528, 3
        %s531 = smul.addr %s530, 2
        %s532 = smul.addr %s531, 8
        %s533 = scalar_lea.vmem %s0, %s532
        %p534 = pneg %p54
        %p535 = pneg %p51
        %p536 = pneg %p75
        %p537 = pneg %p72
        %p538 = pneg %p96
        %p539 = pneg %p93
        %p540 = pneg %p117
        %p541 = pneg %p114
        %p542 = pneg %p138
        %p543 = pneg %p135
        %p544 = pneg %p159
        %p545 = pneg %p156
        %p546 = pneg %p180
        %p547 = pneg %p177
        %p548 = pneg %p201
        %p549 = pneg %p198
        %p550 = pneg %p222
        %p551 = pneg %p219
        %p552 = pneg %p243
        %p553 = pneg %p240
        %p554 = pneg %p264
        %p555 = pneg %p261
        %p556 = pneg %p285
        %p557 = pneg %p282
        %p558 = pneg %p306
        %p559 = pneg %p303
        %p560 = pneg %p327
        %p561 = pneg %p324
        %p562 = pneg %p348
        %p563 = pneg %p345
        %p564 = pneg %p369
        %p565 = pneg %p366
        %p566 = pneg %p390
        %p567 = pneg %p387
        %p568 = pneg %p416
        %p569 = pneg %p413
        %s570 = sand.u32 %s403, 1
        %s571 = scalar_lea.sflag [#allocation5], %s570
        %s572 = sand.u32 %s403, 1
        %s573 = smul.addr %s572, 32
        %s574 = scalar_lea.vmem [#allocation8], %s573
        %s575 = smul.u32 2, %s33
        %p576 = scmp.lt.s32.totalorder %s575, 3
        %s577 = scalar_select %p576, %s575, 3
        %s578 = smul.addr %s577, 2
        %s579 = smul.addr %s578, 8
        %s580 = scalar_lea.vmem %s0, %s579
        %s581 = smul.u32 2, %s33
        %s582 = smul.u32 2, %s33
        %v584 = vld [vmem:[%s580] sm:$0xff]
        %v585 = vld [vmem:[%s580 + $0x8] sm:$0xff]
        %v586 = vld [vmem:[%s580 + $0x10] sm:$0xff]
        %v587 = vld [vmem:[%s580 + $0x18] sm:$0xff]
        %v588 = vld [vmem:[%s9] sm:$0x1]
        %v589 = vld [vmem:[%s10] sm:$0x1]
        %vm590 = vcmask 523264
        %v591 = vsel %vm590, %v584, 0.0
        %592 = vadd.xlane.f32.xlu0 %v591
        %v593 = vpop.xlane.xlu0 %592
        %v594 = vsel %vm590, %v585, 0.0
        %595 = vadd.xlane.f32.xlu0 %v594
        %v596 = vpop.xlane.xlu0 %595
        %v597 = vsel %vm590, %v586, 0.0
        %598 = vadd.xlane.f32.xlu0 %v597
        %v599 = vpop.xlane.xlu0 %598
        %v600 = vsel %vm590, %v587, 0.0
        %601 = vadd.xlane.f32.xlu0 %v600
        %v602 = vpop.xlane.xlu0 %601
        %v603 = vrcp.pop 64.0
        %v604 = vmul.f32 %v593, %v603
        %v605 = vmul.f32 %v596, %v603
        %v606 = vmul.f32 %v599, %v603
        %v607 = vmul.f32 %v602, %v603
        %v608 = vsub.f32 %v584, %v604
        %v609 = vsub.f32 %v585, %v605
        %v610 = vsub.f32 %v586, %v606
        %v611 = vsub.f32 %v587, %v607
        %v612 = vmul.f32 %v608, %v608
        %v613 = vmul.f32 %v609, %v609
        %v614 = vmul.f32 %v610, %v610
        %v615 = vmul.f32 %v611, %v611
        %v616 = vsel %vm590, %v612, 0.0
        %617 = vadd.xlane.f32.xlu0 %v616
        %v618 = vpop.xlane.xlu0 %617
        %v619 = vsel %vm590, %v613, 0.0
        %620 = vadd.xlane.f32.xlu0 %v619
        %v621 = vpop.xlane.xlu0 %620
        %v622 = vsel %vm590, %v614, 0.0
        %623 = vadd.xlane.f32.xlu0 %v622
        %v624 = vpop.xlane.xlu0 %623
        %v625 = vsel %vm590, %v615, 0.0
        %626 = vadd.xlane.f32.xlu0 %v625
        %v627 = vpop.xlane.xlu0 %626
        %v628 = vmul.f32 %v618, %v603
        %v629 = vmul.f32 %v621, %v603
        %v630 = vmul.f32 %v624, %v603
        %v631 = vmul.f32 %v627, %v603
        %v632 = vadd.f32 %v628, 1e-05
        %v633 = vadd.f32 %v629, 1e-05
        %v634 = vadd.f32 %v630, 1e-05
        %v635 = vadd.f32 %v631, 1e-05
        %v636 = vrsqrt.pop %v632
        %v637 = vrsqrt.pop %v633
        %v638 = vrsqrt.pop %v634
        %v639 = vrsqrt.pop %v635
        %v640 = vmul.f32 %v608, %v636
        %v641 = vmul.f32 %v609, %v637
        %v642 = vmul.f32 %v610, %v638
        %v643 = vmul.f32 %v611, %v639
        %v645 = vlaneseq
        %v646 = vshrl.u32 %v645, 7
        %v647 = vsub.s32 0, %v646
        %v648 = vrot.slane %v588, %v647
        %v650 = vmul.f32 %v640, %v648
        %v651 = vmul.f32 %v641, %v648
        %v652 = vmul.f32 %v642, %v648
        %v653 = vmul.f32 %v643, %v648
        %v655 = vlaneseq
        %v656 = vshrl.u32 %v655, 7
        %v657 = vsub.s32 0, %v656
        %v658 = vrot.slane %v589, %v657
        %v660 = vadd.f32 %v650, %v658
        %v661 = vadd.f32 %v651, %v658
        %v662 = vadd.f32 %v652, %v658
        %v663 = vadd.f32 %v653, %v658
        %v664 = vpack.c.bf16 %v661, %v660
        %v665 = vpack.c.bf16 %v663, %v662
        %v666 = vld [vmem:[%s1] sm:$0xf]
        %v667 = vld [vmem:[%s1 + $0x4] sm:$0xf]
        %v668 = vld [vmem:[%s1 + $0x8] sm:$0xf]
        %v669 = vld [vmem:[%s1 + $0xc] sm:$0xf]
        %v670 = vld [vmem:[%s1 + $0x10] sm:$0xf]
        %v671 = vld [vmem:[%s1 + $0x14] sm:$0xf]
        %v672 = vld [vmem:[%s1 + $0x18] sm:$0xf]
        %v673 = vld [vmem:[%s1 + $0x1c] sm:$0xf]
        %v674 = vld [vmem:[%s4] sm:$0x1]
        %v676 = vlaneseq
        %v677 = vshrl.u32 %v676, 7
        %v678 = vsub.s32 0, %v677
        %v679 = vrot.slane %v674, %v678
        %v689 = vunpack.c.l.b16 %v666
        %v690 = vunpack.c.l.b16 %v667
        %v691 = vunpack.c.l.b16 %v668
        %v692 = vunpack.c.l.b16 %v669
        %v693 = vunpack.c.l.b16 %v670
        %v694 = vunpack.c.l.b16 %v671
        %v695 = vunpack.c.l.b16 %v672
        %v696 = vunpack.c.l.b16 %v673
        %v697 = vpack.c.b16 %v690, %v689
        %v698 = vpack.c.b16 %v692, %v691
        %v699 = vpack.c.b16 %v694, %v693
        %v700 = vpack.c.b16 %v696, %v695
        %v706 = vsel %vm590, %v664, 0
        %v709 = vsel %vm590, %v665, 0
        %711 = vmatprep.subr.bf16.mxu0 0
        %712 = vmatpush1.bf16.msra.mxu0 %v697
        %713 = vmatprep.subr.bf16.mxu0 0
        %714 = vmatpush1.bf16.msra.mxu0 %v698
        %715 = vmatprep.subr.bf16.mxu0 0
        %716 = vmatpush1.bf16.msra.mxu0 %v699
        %717 = vmatprep.subr.bf16.mxu0 0
        %718 = vmatpush1.bf16.msra.mxu0 %v700
        %719 = vmatprep.subr.bf16.mxu0 0
        %720 = vmatpush1.bf16.msra.mxu0 0
        %721 = vmatprep.subr.bf16.mxu0 0
        %722 = vmatpush1.bf16.msra.mxu0 0
        %723 = vmatprep.subr.bf16.mxu0 0
        %724 = vmatpush1.bf16.msra.mxu0 0
        %725 = vmatprep.subr.bf16.mxu0 0
        %726 = vmatpush1.bf16.msra.mxu0 0
        %727 = vmatprep.subr.bf16.mxu0 0
        %728 = vmatpush1.bf16.msra.mxu0 0
        %729 = vmatprep.subr.bf16.mxu0 0
        %730 = vmatpush1.bf16.msra.mxu0 0
        %731 = vmatprep.subr.bf16.mxu0 0
        %732 = vmatpush1.bf16.msra.mxu0 0
        %733 = vmatprep.subr.bf16.mxu0 0
        %734 = vmatpush1.bf16.msra.mxu0 0
        %735 = vmatprep.subr.bf16.mxu0 0
        %736 = vmatpush1.bf16.msra.mxu0 0
        %737 = vmatprep.subr.bf16.mxu0 0
        %738 = vmatpush1.bf16.msra.mxu0 0
        %739 = vmatprep.subr.bf16.mxu0 0
        %740 = vmatpush1.bf16.msra.mxu0 0
        %741 = vmatprep.subr.bf16.mxu0 0
        %742 = vmatpush1.bf16.msra.mxu0 0
        %743 = vmatprep.mubr.bf16.mxu0 0
        %744 = vmatmul.mubr.bf16.gmra.mrb[0].mxu0 %v706
        %v745 = vpop.f32.mrb[0].mxu0
        %v746 = vadd.f32 %v679, %v745
        %v747 = vpop.f32.mrb[0].mxu0
        %v748 = vpop.f32.mrb[0].mxu0
        %v749 = vadd.f32 %v679, %v748
        %v750 = vpop.f32.mrb[0].mxu0
        %751 = vmatprep.mubr.bf16.mxu0 0
        %752 = vmatmul.mubr.bf16.gmra.mrb[0].mxu0 %v709
        %v753 = vpop.f32.mrb[0].mxu0
        %v754 = vadd.f32 %v679, %v753
        %v755 = vpop.f32.mrb[0].mxu0
        %v756 = vpop.f32.mrb[0].mxu0
        %v757 = vadd.f32 %v679, %v756
        %v758 = vpop.f32.mrb[0].mxu0
        %759 = vdwg.mxu0
        %v760 = vld [vmem:[%s2] sm:$0xf]
        %v761 = vld [vmem:[%s2 + $0x4] sm:$0xf]
        %v762 = vld [vmem:[%s2 + $0x8] sm:$0xf]
        %v763 = vld [vmem:[%s2 + $0xc] sm:$0xf]
        %v764 = vld [vmem:[%s2 + $0x10] sm:$0xf]
        %v765 = vld [vmem:[%s2 + $0x14] sm:$0xf]
        %v766 = vld [vmem:[%s2 + $0x18] sm:$0xf]
        %v767 = vld [vmem:[%s2 + $0x1c] sm:$0xf]
        %v768 = vld [vmem:[%s5] sm:$0x1]
        %v770 = vlaneseq
        %v771 = vshrl.u32 %v770, 7
        %v772 = vsub.s32 0, %v771
        %v773 = vrot.slane %v768, %v772
        %v783 = vunpack.c.l.b16 %v760
        %v784 = vunpack.c.l.b16 %v761
        %v785 = vunpack.c.l.b16 %v762
        %v786 = vunpack.c.l.b16 %v763
        %v787 = vunpack.c.l.b16 %v764
        %v788 = vunpack.c.l.b16 %v765
        %v789 = vunpack.c.l.b16 %v766
        %v790 = vunpack.c.l.b16 %v767
        %v791 = vpack.c.b16 %v784, %v783
        %v792 = vpack.c.b16 %v786, %v785
        %v793 = vpack.c.b16 %v788, %v787
        %v794 = vpack.c.b16 %v790, %v789
        %799 = vmatprep.subr.bf16.mxu0 0
        %800 = vmatpush1.bf16.msra.mxu0 %v791
        %801 = vmatprep.subr.bf16.mxu0 0
        %802 = vmatpush1.bf16.msra.mxu0 %v792
        %803 = vmatprep.subr.bf16.mxu0 0
        %804 = vmatpush1.bf16.msra.mxu0 %v793
        %805 = vmatprep.subr.bf16.mxu0 0
        %806 = vmatpush1.bf16.msra.mxu0 %v794
        %807 = vmatprep.subr.bf16.mxu0 0
        %808 = vmatpush1.bf16.msra.mxu0 0
        %809 = vmatprep.subr.bf16.mxu0 0
        %810 = vmatpush1.bf16.msra.mxu0 0
        %811 = vmatprep.subr.bf16.mxu0 0
        %812 = vmatpush1.bf16.msra.mxu0 0
        %813 = vmatprep.subr.bf16.mxu0 0
        %814 = vmatpush1.bf16.msra.mxu0 0
        %815 = vmatprep.subr.bf16.mxu0 0
        %816 = vmatpush1.bf16.msra.mxu0 0
        %817 = vmatprep.subr.bf16.mxu0 0
        %818 = vmatpush1.bf16.msra.mxu0 0
        %819 = vmatprep.subr.bf16.mxu0 0
        %820 = vmatpush1.bf16.msra.mxu0 0
        %821 = vmatprep.subr.bf16.mxu0 0
        %822 = vmatpush1.bf16.msra.mxu0 0
        %823 = vmatprep.subr.bf16.mxu0 0
        %824 = vmatpush1.bf16.msra.mxu0 0
        %825 = vmatprep.subr.bf16.mxu0 0
        %826 = vmatpush1.bf16.msra.mxu0 0
        %827 = vmatprep.subr.bf16.mxu0 0
        %828 = vmatpush1.bf16.msra.mxu0 0
        %829 = vmatprep.subr.bf16.mxu0 0
        %830 = vmatpush1.bf16.msra.mxu0 0
        %831 = vmatprep.mubr.bf16.mxu0 0
        %832 = vmatmul.mubr.bf16.gmra.mrb[0].mxu0 %v706
        %v833 = vpop.f32.mrb[0].mxu0
        %v834 = vadd.f32 %v773, %v833
        %v835 = vpop.f32.mrb[0].mxu0
        %v836 = vpop.f32.mrb[0].mxu0
        %v837 = vadd.f32 %v773, %v836
        %v838 = vpop.f32.mrb[0].mxu0
        %839 = vmatprep.mubr.bf16.mxu0 0
        %840 = vmatmul.mubr.bf16.gmra.mrb[0].mxu0 %v709
        %v841 = vpop.f32.mrb[0].mxu0
        %v842 = vadd.f32 %v773, %v841
        %v843 = vpop.f32.mrb[0].mxu0
        %v844 = vpop.f32.mrb[0].mxu0
        %v845 = vadd.f32 %v773, %v844
        %v846 = vpop.f32.mrb[0].mxu0
        %847 = vdwg.mxu0
        %v848 = vld [vmem:[#allocation3] sm:$0xf]
        %v849 = vld [vmem:[#allocation3 + $0x4] sm:$0xf]
        %v850 = vld [vmem:[#allocation3 + $0x8] sm:$0xf]
        %v851 = vld [vmem:[#allocation3 + $0xc] sm:$0xf]
        %v852 = vld [vmem:[#allocation3 + $0x10] sm:$0xf]
        %v853 = vld [vmem:[#allocation3 + $0x14] sm:$0xf]
        %v854 = vld [vmem:[#allocation3 + $0x18] sm:$0xf]
        %v855 = vld [vmem:[#allocation3 + $0x1c] sm:$0xf]
        %v856 = vld [vmem:[%s6] sm:$0x1]
        %v858 = vlaneseq
        %v859 = vshrl.u32 %v858, 7
        %v860 = vsub.s32 0, %v859
        %v861 = vrot.slane %v856, %v860
        %v871 = vunpack.c.l.b16 %v848
        %v872 = vunpack.c.l.b16 %v849
        %v873 = vunpack.c.l.b16 %v850
        %v874 = vunpack.c.l.b16 %v851
        %v875 = vunpack.c.l.b16 %v852
        %v876 = vunpack.c.l.b16 %v853
        %v877 = vunpack.c.l.b16 %v854
        %v878 = vunpack.c.l.b16 %v855
        %v879 = vpack.c.b16 %v872, %v871
        %v880 = vpack.c.b16 %v874, %v873
        %v881 = vpack.c.b16 %v876, %v875
        %v882 = vpack.c.b16 %v878, %v877
        %887 = vmatprep.subr.bf16.mxu0 0
        %888 = vmatpush1.bf16.msra.mxu0 %v879
        %889 = vmatprep.subr.bf16.mxu0 0
        %890 = vmatpush1.bf16.msra.mxu0 %v880
        %891 = vmatprep.subr.bf16.mxu0 0
        %892 = vmatpush1.bf16.msra.mxu0 %v881
        %893 = vmatprep.subr.bf16.mxu0 0
        %894 = vmatpush1.bf16.msra.mxu0 %v882
        %895 = vmatprep.subr.bf16.mxu0 0
        %896 = vmatpush1.bf16.msra.mxu0 0
        %897 = vmatprep.subr.bf16.mxu0 0
        %898 = vmatpush1.bf16.msra.mxu0 0
        %899 = vmatprep.subr.bf16.mxu0 0
        %900 = vmatpush1.bf16.msra.mxu0 0
        %901 = vmatprep.subr.bf16.mxu0 0
        %902 = vmatpush1.bf16.msra.mxu0 0
        %903 = vmatprep.subr.bf16.mxu0 0
        %904 = vmatpush1.bf16.msra.mxu0 0
        %905 = vmatprep.subr.bf16.mxu0 0
        %906 = vmatpush1.bf16.msra.mxu0 0
        %907 = vmatprep.subr.bf16.mxu0 0
        %908 = vmatpush1.bf16.msra.mxu0 0
        %909 = vmatprep.subr.bf16.mxu0 0
        %910 = vmatpush1.bf16.msra.mxu0 0
        %911 = vmatprep.subr.bf16.mxu0 0
        %912 = vmatpush1.bf16.msra.mxu0 0
        %913 = vmatprep.subr.bf16.mxu0 0
        %914 = vmatpush1.bf16.msra.mxu0 0
        %915 = vmatprep.subr.bf16.mxu0 0
        %916 = vmatpush1.bf16.msra.mxu0 0
        %917 = vmatprep.subr.bf16.mxu0 0
        %918 = vmatpush1.bf16.msra.mxu0 0
        %919 = vmatprep.mubr.bf16.mxu0 0
        %920 = vmatmul.mubr.bf16.gmra.mrb[0].mxu0 %v706
        %v921 = vpop.f32.mrb[0].mxu0
        %v922 = vadd.f32 %v861, %v921
        %v923 = vpop.f32.mrb[0].mxu0
        %v924 = vpop.f32.mrb[0].mxu0
        %v925 = vadd.f32 %v861, %v924
        %v926 = vpop.f32.mrb[0].mxu0
        %927 = vmatprep.mubr.bf16.mxu0 0
        %928 = vmatmul.mubr.bf16.gmra.mrb[0].mxu0 %v709
        %v929 = vpop.f32.mrb[0].mxu0
        %v930 = vadd.f32 %v861, %v929
        %v931 = vpop.f32.mrb[0].mxu0
        %v932 = vpop.f32.mrb[0].mxu0
        %v933 = vadd.f32 %v861, %v932
        %v934 = vpop.f32.mrb[0].mxu0
        %935 = vdwg.mxu0
        %v936 = vpack.c.bf16 %v749, %v746
        %v937 = vpack.c.bf16 %v757, %v754
        %v938 = vpack.c.bf16 %v837, %v834
        %v939 = vpack.c.bf16 %v845, %v842
        %v940 = vpack.c.bf16 %v925, %v922
        %v941 = vpack.c.bf16 %v933, %v930
        %vm942 = vcmask 130048
        %v944 = vsel %vm942, %v936, 0
        %v947 = vsel %vm942, %v938, 0
        %949 = vmatprep.subr.bf16.mxu0 0
        %950 = vmatpush1.bf16.xpose.msra.mxu0 %v947
        %951 = vmatprep.subr.bf16.mxu0 0
        %952 = vmatpush1.bf16.xpose.msra.mxu0 0
        %953 = vmatprep.subr.bf16.mxu0 0
        %954 = vmatpush1.bf16.xpose.msra.mxu0 0
        %955 = vmatprep.subr.bf16.mxu0 0
        %956 = vmatpush1.bf16.xpose.msra.mxu0 0
        %957 = vmatprep.subr.bf16.mxu0 0
        %958 = vmatpush1.bf16.xpose.msra.mxu0 0
        %959 = vmatprep.subr.bf16.mxu0 0
        %960 = vmatpush1.bf16.xpose.msra.mxu0 0
        %961 = vmatprep.subr.bf16.mxu0 0
        %962 = vmatpush1.bf16.xpose.msra.mxu0 0
        %963 = vmatprep.subr.bf16.mxu0 0
        %964 = vmatpush1.bf16.xpose.msra.mxu0 0
        %965 = vmatprep.subr.bf16.mxu0 0
        %966 = vmatpush1.bf16.xpose.msra.mxu0 0
        %967 = vmatprep.subr.bf16.mxu0 0
        %968 = vmatpush1.bf16.xpose.msra.mxu0 0
        %969 = vmatprep.subr.bf16.mxu0 0
        %970 = vmatpush1.bf16.xpose.msra.mxu0 0
        %971 = vmatprep.subr.bf16.mxu0 0
        %972 = vmatpush1.bf16.xpose.msra.mxu0 0
        %973 = vmatprep.subr.bf16.mxu0 0
        %974 = vmatpush1.bf16.xpose.msra.mxu0 0
        %975 = vmatprep.subr.bf16.mxu0 0
        %976 = vmatpush1.bf16.xpose.msra.mxu0 0
        %977 = vmatprep.subr.bf16.mxu0 0
        %978 = vmatpush1.bf16.xpose.msra.mxu0 0
        %979 = vmatprep.subr.bf16.mxu0 0
        %980 = vmatpush1.bf16.xpose.msra.mxu0 0
        %981 = vmatprep.mubr.bf16.mxu0 0
        %982 = vmatmul.mubr.bf16.gmra.mrb[0].mxu0 %v944
        %v983 = vpop.f32.mrb[0].mxu0
        %v984 = vadd.f32 0.0, %v983
        %v985 = vpop.f32.mrb[0].mxu0
        %v986 = vpop.f32.mrb[0].mxu0
        %v987 = vadd.f32 0.0, %v986
        %v988 = vpop.f32.mrb[0].mxu0
        %989 = vdwg.mxu0
        %v991 = vsel %vm942, %v937, 0
        %v994 = vsel %vm942, %v939, 0
        %996 = vmatprep.subr.bf16.mxu0 0
        %997 = vmatpush1.bf16.xpose.msra.mxu0 %v994
        %998 = vmatprep.subr.bf16.mxu0 0
        %999 = vmatpush1.bf16.xpose.msra.mxu0 0
        %1000 = vmatprep.subr.bf16.mxu0 0
        %1001 = vmatpush1.bf16.xpose.msra.mxu0 0
        %1002 = vmatprep.subr.bf16.mxu0 0
        %1003 = vmatpush1.bf16.xpose.msra.mxu0 0
        %1004 = vmatprep.subr.bf16.mxu0 0
        %1005 = vmatpush1.bf16.xpose.msra.mxu0 0
        %1006 = vmatprep.subr.bf16.mxu0 0
        %1007 = vmatpush1.bf16.xpose.msra.mxu0 0
        %1008 = vmatprep.subr.bf16.mxu0 0
        %1009 = vmatpush1.bf16.xpose.msra.mxu0 0
        %1010 = vmatprep.subr.bf16.mxu0 0
        %1011 = vmatpush1.bf16.xpose.msra.mxu0 0
        %1012 = vmatprep.subr.bf16.mxu0 0
        %1013 = vmatpush1.bf16.xpose.msra.mxu0 0
        %1014 = vmatprep.subr.bf16.mxu0 0
        %1015 = vmatpush1.bf16.xpose.msra.mxu0 0
        %1016 = vmatprep.subr.bf16.mxu0 0
        %1017 = vmatpush1.bf16.xpose.msra.mxu0 0
        %1018 = vmatprep.subr.bf16.mxu0 0
        %1019 = vmatpush1.bf16.xpose.msra.mxu0 0
        %1020 = vmatprep.subr.bf16.mxu0 0
        %1021 = vmatpush1.bf16.xpose.msra.mxu0 0
        %1022 = vmatprep.subr.bf16.mxu0 0
        %1023 = vmatpush1.bf16.xpose.msra.mxu0 0
        %1024 = vmatprep.subr.bf16.mxu0 0
        %1025 = vmatpush1.bf16.xpose.msra.mxu0 0
        %1026 = vmatprep.subr.bf16.mxu0 0
        %1027 = vmatpush1.bf16.xpose.msra.mxu0 0
        %1028 = vmatprep.mubr.bf16.mxu0 0
        %1029 = vmatmul.mubr.bf16.gmra.mrb[0].mxu0 %v991
        %v1030 = vpop.f32.mrb[0].mxu0
        %v1031 = vadd.f32 0.0, %v1030
        %v1032 = vpop.f32.mrb[0].mxu0
        %v1033 = vpop.f32.mrb[0].mxu0
        %v1034 = vadd.f32 0.0, %v1033
        %v1035 = vpop.f32.mrb[0].mxu0
        %1036 = vdwg.mxu0
        %v1037 = vsel %vm942, %v984, -inf
        %1038 = vmax.xlane.f32.xlu0 %v1037
        %v1039 = vpop.xlane.xlu0 %1038
        %v1040 = vsel %vm942, %v987, -inf
        %1041 = vmax.xlane.f32.xlu0 %v1040
        %v1042 = vpop.xlane.xlu0 %1041
        %v1043 = vsel %vm942, %v1031, -inf
        %1044 = vmax.xlane.f32.xlu0 %v1043
        %v1045 = vpop.xlane.xlu0 %1044
        %v1046 = vsel %vm942, %v1034, -inf
        %1047 = vmax.xlane.f32.xlu0 %v1046
        %v1048 = vpop.xlane.xlu0 %1047
        %v1049 = vsub.f32 %v984, %v1039
        %v1050 = vsub.f32 %v987, %v1042
        %v1051 = vsub.f32 %v1031, %v1045
        %v1052 = vsub.f32 %v1034, %v1048
        %v1053 = vmul.f32 %v1049, 1.442695
        %v1054 = vpow.pop %v1053
        %v1055 = vmul.f32 %v1050, 1.442695
        %v1056 = vpow.pop %v1055
        %v1057 = vmul.f32 %v1051, 1.442695
        %v1058 = vpow.pop %v1057
        %v1059 = vmul.f32 %v1052, 1.442695
        %v1060 = vpow.pop %v1059
        %v1061 = vsel %vm942, %v1054, 0.0
        %1062 = vadd.xlane.f32.xlu0 %v1061
        %v1063 = vpop.xlane.xlu0 %1062
        %v1064 = vsel %vm942, %v1056, 0.0
        %1065 = vadd.xlane.f32.xlu0 %v1064
        %v1066 = vpop.xlane.xlu0 %1065
        %v1067 = vsel %vm942, %v1058, 0.0
        %1068 = vadd.xlane.f32.xlu0 %v1067
        %v1069 = vpop.xlane.xlu0 %1068
        %v1070 = vsel %vm942, %v1060, 0.0
        %1071 = vadd.xlane.f32.xlu0 %v1070
        %v1072 = vpop.xlane.xlu0 %1071
        %v1073 = vrcp.pop %v1063
        %v1074 = vrcp.pop %v1066
        %v1075 = vrcp.pop %v1069
        %v1076 = vrcp.pop %v1072
        %v1077 = vmul.f32 %v1054, %v1073
        %v1078 = vmul.f32 %v1056, %v1074
        %v1079 = vmul.f32 %v1058, %v1075
        %v1080 = vmul.f32 %v1060, %v1076
        %v1081 = vpack.c.bf16 %v1078, %v1077
        %v1082 = vpack.c.bf16 %v1080, %v1079
        %v1084 = vsel %vm942, %v1081, 0
        %1086 = vmatprep.subr.bf16.mxu0 0
        %1087 = vmatpush1.bf16.msra.mxu0 %v940
        %1088 = vmatprep.subr.bf16.mxu0 0
        %1089 = vmatpush1.bf16.msra.mxu0 0
        %1090 = vmatprep.subr.bf16.mxu0 0
        %1091 = vmatpush1.bf16.msra.mxu0 0
        %1092 = vmatprep.subr.bf16.mxu0 0
        %1093 = vmatpush1.bf16.msra.mxu0 0
        %1094 = vmatprep.subr.bf16.mxu0 0
        %1095 = vmatpush1.bf16.msra.mxu0 0
        %1096 = vmatprep.subr.bf16.mxu0 0
        %1097 = vmatpush1.bf16.msra.mxu0 0
        %1098 = vmatprep.subr.bf16.mxu0 0
        %1099 = vmatpush1.bf16.msra.mxu0 0
        %1100 = vmatprep.subr.bf16.mxu0 0
        %1101 = vmatpush1.bf16.msra.mxu0 0
        %1102 = vmatprep.subr.bf16.mxu0 0
        %1103 = vmatpush1.bf16.msra.mxu0 0
        %1104 = vmatprep.subr.bf16.mxu0 0
        %1105 = vmatpush1.bf16.msra.mxu0 0
        %1106 = vmatprep.subr.bf16.mxu0 0
        %1107 = vmatpush1.bf16.msra.mxu0 0
        %1108 = vmatprep.subr.bf16.mxu0 0
        %1109 = vmatpush1.bf16.msra.mxu0 0
        %1110 = vmatprep.subr.bf16.mxu0 0
        %1111 = vmatpush1.bf16.msra.mxu0 0
        %1112 = vmatprep.subr.bf16.mxu0 0
        %1113 = vmatpush1.bf16.msra.mxu0 0
        %1114 = vmatprep.subr.bf16.mxu0 0
        %1115 = vmatpush1.bf16.msra.mxu0 0
        %1116 = vmatprep.subr.bf16.mxu0 0
        %1117 = vmatpush1.bf16.msra.mxu0 0
        %1118 = vmatprep.mubr.bf16.mxu0 0
        %1119 = vmatmul.mubr.bf16.gmra.mrb[0].mxu0 %v1084
        %v1120 = vpop.f32.mrb[0].mxu0
        %v1121 = vadd.f32 0.0, %v1120
        %v1122 = vpop.f32.mrb[0].mxu0
        %v1123 = vpop.f32.mrb[0].mxu0
        %v1124 = vadd.f32 0.0, %v1123
        %v1125 = vpop.f32.mrb[0].mxu0
        %1126 = vdwg.mxu0
        %v1128 = vsel %vm942, %v1082, 0
        %1130 = vmatprep.subr.bf16.mxu0 0
        %1131 = vmatpush1.bf16.msra.mxu0 %v941
        %1132 = vmatprep.subr.bf16.mxu0 0
        %1133 = vmatpush1.bf16.msra.mxu0 0
        %1134 = vmatprep.subr.bf16.mxu0 0
        %1135 = vmatpush1.bf16.msra.mxu0 0
        %1136 = vmatprep.subr.bf16.mxu0 0
        %1137 = vmatpush1.bf16.msra.mxu0 0
        %1138 = vmatprep.subr.bf16.mxu0 0
        %1139 = vmatpush1.bf16.msra.mxu0 0
        %1140 = vmatprep.subr.bf16.mxu0 0
        %1141 = vmatpush1.bf16.msra.mxu0 0
        %1142 = vmatprep.subr.bf16.mxu0 0
        %1143 = vmatpush1.bf16.msra.mxu0 0
        %1144 = vmatprep.subr.bf16.mxu0 0
        %1145 = vmatpush1.bf16.msra.mxu0 0
        %1146 = vmatprep.subr.bf16.mxu0 0
        %1147 = vmatpush1.bf16.msra.mxu0 0
        %1148 = vmatprep.subr.bf16.mxu0 0
        %1149 = vmatpush1.bf16.msra.mxu0 0
        %1150 = vmatprep.subr.bf16.mxu0 0
        %1151 = vmatpush1.bf16.msra.mxu0 0
        %1152 = vmatprep.subr.bf16.mxu0 0
        %1153 = vmatpush1.bf16.msra.mxu0 0
        %1154 = vmatprep.subr.bf16.mxu0 0
        %1155 = vmatpush1.bf16.msra.mxu0 0
        %1156 = vmatprep.subr.bf16.mxu0 0
        %1157 = vmatpush1.bf16.msra.mxu0 0
        %1158 = vmatprep.subr.bf16.mxu0 0
        %1159 = vmatpush1.bf16.msra.mxu0 0
        %1160 = vmatprep.subr.bf16.mxu0 0
        %1161 = vmatpush1.bf16.msra.mxu0 0
        %1162 = vmatprep.mubr.bf16.mxu0 0
        %1163 = vmatmul.mubr.bf16.gmra.mrb[0].mxu0 %v1128
        %v1164 = vpop.f32.mrb[0].mxu0
        %v1165 = vadd.f32 0.0, %v1164
        %v1166 = vpop.f32.mrb[0].mxu0
        %v1167 = vpop.f32.mrb[0].mxu0
        %v1168 = vadd.f32 0.0, %v1167
        %v1169 = vpop.f32.mrb[0].mxu0
        %1170 = vdwg.mxu0
        %1171 = vst.msk [vmem:[#allocation2] sm:$0xff] %vm942, %v1121
        %1172 = vst.msk [vmem:[#allocation2 + $0x8] sm:$0xff] %vm942, %v1124
        %1173 = vst.msk [vmem:[#allocation2 + $0x10] sm:$0xff] %vm942, %v1165
        %1174 = vst.msk [vmem:[#allocation2 + $0x18] sm:$0xff] %vm942, %v1168
        %1176 = vrot.lane.b32.xlu0 %v936, 112
        %v1177 = vpop.permute.xlu0 %1176
        %1179 = vrot.lane.b32.xlu0 %v938, 112
        %v1180 = vpop.permute.xlu0 %1179
        %v1182 = vsel %vm942, %v1177, 0
        %v1185 = vsel %vm942, %v1180, 0
        %1187 = vmatprep.subr.bf16.mxu0 0
        %1188 = vmatpush1.bf16.xpose.msra.mxu0 %v1185
        %1189 = vmatprep.subr.bf16.mxu0 0
        %1190 = vmatpush1.bf16.xpose.msra.mxu0 0
        %1191 = vmatprep.subr.bf16.mxu0 0
        %1192 = vmatpush1.bf16.xpose.msra.mxu0 0
        %1193 = vmatprep.subr.bf16.mxu0 0
        %1194 = vmatpush1.bf16.xpose.msra.mxu0 0
        %1195 = vmatprep.subr.bf16.mxu0 0
        %1196 = vmatpush1.bf16.xpose.msra.mxu0 0
        %1197 = vmatprep.subr.bf16.mxu0 0
        %1198 = vmatpush1.bf16.xpose.msra.mxu0 0
        %1199 = vmatprep.subr.bf16.mxu0 0
        %1200 = vmatpush1.bf16.xpose.msra.mxu0 0
        %1201 = vmatprep.subr.bf16.mxu0 0
        %1202 = vmatpush1.bf16.xpose.msra.mxu0 0
        %1203 = vmatprep.subr.bf16.mxu0 0
        %1204 = vmatpush1.bf16.xpose.msra.mxu0 0
        %1205 = vmatprep.subr.bf16.mxu0 0
        %1206 = vmatpush1.bf16.xpose.msra.mxu0 0
        %1207 = vmatprep.subr.bf16.mxu0 0
        %1208 = vmatpush1.bf16.xpose.msra.mxu0 0
        %1209 = vmatprep.subr.bf16.mxu0 0
        %1210 = vmatpush1.bf16.xpose.msra.mxu0 0
        %1211 = vmatprep.subr.bf16.mxu0 0
        %1212 = vmatpush1.bf16.xpose.msra.mxu0 0
        %1213 = vmatprep.subr.bf16.mxu0 0
        %1214 = vmatpush1.bf16.xpose.msra.mxu0 0
        %1215 = vmatprep.subr.bf16.mxu0 0
        %1216 = vmatpush1.bf16.xpose.msra.mxu0 0
        %1217 = vmatprep.subr.bf16.mxu0 0
        %1218 = vmatpush1.bf16.xpose.msra.mxu0 0
        %1219 = vmatprep.mubr.bf16.mxu0 0
        %1220 = vmatmul.mubr.bf16.gmra.mrb[0].mxu0 %v1182
        %v1221 = vpop.f32.mrb[0].mxu0
        %v1222 = vadd.f32 0.0, %v1221
        %v1223 = vpop.f32.mrb[0].mxu0
        %v1224 = vpop.f32.mrb[0].mxu0
        %v1225 = vadd.f32 0.0, %v1224
        %v1226 = vpop.f32.mrb[0].mxu0
        %1227 = vdwg.mxu0
        %1229 = vrot.lane.b32.xlu0 %v937, 112
        %v1230 = vpop.permute.xlu0 %1229
        %1232 = vrot.lane.b32.xlu0 %v939, 112
        %v1233 = vpop.permute.xlu0 %1232
        %v1235 = vsel %vm942, %v1230, 0
        %v1238 = vsel %vm942, %v1233, 0
        %1240 = vmatprep.subr.bf16.mxu0 0
        %1241 = vmatpush1.bf16.xpose.msra.mxu0 %v1238
        %1242 = vmatprep.subr.bf16.mxu0 0
        %1243 = vmatpush1.bf16.xpose.msra.mxu0 0
        %1244 = vmatprep.subr.bf16.mxu0 0
        %1245 = vmatpush1.bf16.xpose.msra.mxu0 0
        %1246 = vmatprep.subr.bf16.mxu0 0
        %1247 = vmatpush1.bf16.xpose.msra.mxu0 0
        %1248 = vmatprep.subr.bf16.mxu0 0
        %1249 = vmatpush1.bf16.xpose.msra.mxu0 0
        %1250 = vmatprep.subr.bf16.mxu0 0
        %1251 = vmatpush1.bf16.xpose.msra.mxu0 0
        %1252 = vmatprep.subr.bf16.mxu0 0
        %1253 = vmatpush1.bf16.xpose.msra.mxu0 0
        %1254 = vmatprep.subr.bf16.mxu0 0
        %1255 = vmatpush1.bf16.xpose.msra.mxu0 0
        %1256 = vmatprep.subr.bf16.mxu0 0
        %1257 = vmatpush1.bf16.xpose.msra.mxu0 0
        %1258 = vmatprep.subr.bf16.mxu0 0
        %1259 = vmatpush1.bf16.xpose.msra.mxu0 0
        %1260 = vmatprep.subr.bf16.mxu0 0
        %1261 = vmatpush1.bf16.xpose.msra.mxu0 0
        %1262 = vmatprep.subr.bf16.mxu0 0
        %1263 = vmatpush1.bf16.xpose.msra.mxu0 0
        %1264 = vmatprep.subr.bf16.mxu0 0
        %1265 = vmatpush1.bf16.xpose.msra.mxu0 0
        %1266 = vmatprep.subr.bf16.mxu0 0
        %1267 = vmatpush1.bf16.xpose.msra.mxu0 0
        %1268 = vmatprep.subr.bf16.mxu0 0
        %1269 = vmatpush1.bf16.xpose.msra.mxu0 0
        %1270 = vmatprep.subr.bf16.mxu0 0
        %1271 = vmatpush1.bf16.xpose.msra.mxu0 0
        %1272 = vmatprep.mubr.bf16.mxu0 0
        %1273 = vmatmul.mubr.bf16.gmra.mrb[0].mxu0 %v1235
        %v1274 = vpop.f32.mrb[0].mxu0
        %v1275 = vadd.f32 0.0, %v1274
        %v1276 = vpop.f32.mrb[0].mxu0
        %v1277 = vpop.f32.mrb[0].mxu0
        %v1278 = vadd.f32 0.0, %v1277
        %v1279 = vpop.f32.mrb[0].mxu0
        %1280 = vdwg.mxu0
        %v1281 = vsel %vm942, %v1222, -inf
        %1282 = vmax.xlane.f32.xlu0 %v1281
        %v1283 = vpop.xlane.xlu0 %1282
        %v1284 = vsel %vm942, %v1225, -inf
        %1285 = vmax.xlane.f32.xlu0 %v1284
        %v1286 = vpop.xlane.xlu0 %1285
        %v1287 = vsel %vm942, %v1275, -inf
        %1288 = vmax.xlane.f32.xlu0 %v1287
        %v1289 = vpop.xlane.xlu0 %1288
        %v1290 = vsel %vm942, %v1278, -inf
        %1291 = vmax.xlane.f32.xlu0 %v1290
        %v1292 = vpop.xlane.xlu0 %1291
        %v1293 = vsub.f32 %v1222, %v1283
        %v1294 = vsub.f32 %v1225, %v1286
        %v1295 = vsub.f32 %v1275, %v1289
        %v1296 = vsub.f32 %v1278, %v1292
        %v1297 = vmul.f32 %v1293, 1.442695
        %v1298 = vpow.pop %v1297
        %v1299 = vmul.f32 %v1294, 1.442695
        %v1300 = vpow.pop %v1299
        %v1301 = vmul.f32 %v1295, 1.442695
        %v1302 = vpow.pop %v1301
        %v1303 = vmul.f32 %v1296, 1.442695
        %v1304 = vpow.pop %v1303
        %v1305 = vsel %vm942, %v1298, 0.0
        %1306 = vadd.xlane.f32.xlu0 %v1305
        %v1307 = vpop.xlane.xlu0 %1306
        %v1308 = vsel %vm942, %v1300, 0.0
        %1309 = vadd.xlane.f32.xlu0 %v1308
        %v1310 = vpop.xlane.xlu0 %1309
        %v1311 = vsel %vm942, %v1302, 0.0
        %1312 = vadd.xlane.f32.xlu0 %v1311
        %v1313 = vpop.xlane.xlu0 %1312
        %v1314 = vsel %vm942, %v1304, 0.0
        %1315 = vadd.xlane.f32.xlu0 %v1314
        %v1316 = vpop.xlane.xlu0 %1315
        %v1317 = vrcp.pop %v1307
        %v1318 = vrcp.pop %v1310
        %v1319 = vrcp.pop %v1313
        %v1320 = vrcp.pop %v1316
        %v1321 = vmul.f32 %v1298, %v1317
        %v1322 = vmul.f32 %v1300, %v1318
        %v1323 = vmul.f32 %v1302, %v1319
        %v1324 = vmul.f32 %v1304, %v1320
        %v1325 = vpack.c.bf16 %v1322, %v1321
        %v1326 = vpack.c.bf16 %v1324, %v1323
        %1328 = vrot.lane.b32.xlu0 %v940, 112
        %v1329 = vpop.permute.xlu0 %1328
        %v1332 = vsel %vm942, %v1325, 0
        %1334 = vmatprep.subr.bf16.mxu0 0
        %1335 = vmatpush1.bf16.msra.mxu0 %v1329
        %1336 = vmatprep.subr.bf16.mxu0 0
        %1337 = vmatpush1.bf16.msra.mxu0 0
        %1338 = vmatprep.subr.bf16.mxu0 0
        %1339 = vmatpush1.bf16.msra.mxu0 0
        %1340 = vmatprep.subr.bf16.mxu0 0
        %1341 = vmatpush1.bf16.msra.mxu0 0
        %1342 = vmatprep.subr.bf16.mxu0 0
        %1343 = vmatpush1.bf16.msra.mxu0 0
        %1344 = vmatprep.subr.bf16.mxu0 0
        %1345 = vmatpush1.bf16.msra.mxu0 0
        %1346 = vmatprep.subr.bf16.mxu0 0
        %1347 = vmatpush1.bf16.msra.mxu0 0
        %1348 = vmatprep.subr.bf16.mxu0 0
        %1349 = vmatpush1.bf16.msra.mxu0 0
        %1350 = vmatprep.subr.bf16.mxu0 0
        %1351 = vmatpush1.bf16.msra.mxu0 0
        %1352 = vmatprep.subr.bf16.mxu0 0
        %1353 = vmatpush1.bf16.msra.mxu0 0
        %1354 = vmatprep.subr.bf16.mxu0 0
        %1355 = vmatpush1.bf16.msra.mxu0 0
        %1356 = vmatprep.subr.bf16.mxu0 0
        %1357 = vmatpush1.bf16.msra.mxu0 0
        %1358 = vmatprep.subr.bf16.mxu0 0
        %1359 = vmatpush1.bf16.msra.mxu0 0
        %1360 = vmatprep.subr.bf16.mxu0 0
        %1361 = vmatpush1.bf16.msra.mxu0 0
        %1362 = vmatprep.subr.bf16.mxu0 0
        %1363 = vmatpush1.bf16.msra.mxu0 0
        %1364 = vmatprep.subr.bf16.mxu0 0
        %1365 = vmatpush1.bf16.msra.mxu0 0
        %1366 = vmatprep.mubr.bf16.mxu0 0
        %1367 = vmatmul.mubr.bf16.gmra.mrb[0].mxu0 %v1332
        %v1368 = vpop.f32.mrb[0].mxu0
        %v1369 = vadd.f32 0.0, %v1368
        %v1370 = vpop.f32.mrb[0].mxu0
        %v1371 = vpop.f32.mrb[0].mxu0
        %v1372 = vadd.f32 0.0, %v1371
        %v1373 = vpop.f32.mrb[0].mxu0
        %1374 = vdwg.mxu0
        %1376 = vrot.lane.b32.xlu0 %v941, 112
        %v1377 = vpop.permute.xlu0 %1376
        %v1380 = vsel %vm942, %v1326, 0
        %1382 = vmatprep.subr.bf16.mxu0 0
        %1383 = vmatpush1.bf16.msra.mxu0 %v1377
        %1384 = vmatprep.subr.bf16.mxu0 0
        %1385 = vmatpush1.bf16.msra.mxu0 0
        %1386 = vmatprep.subr.bf16.mxu0 0
        %1387 = vmatpush1.bf16.msra.mxu0 0
        %1388 = vmatprep.subr.bf16.mxu0 0
        %1389 = vmatpush1.bf16.msra.mxu0 0
        %1390 = vmatprep.subr.bf16.mxu0 0
        %1391 = vmatpush1.bf16.msra.mxu0 0
        %1392 = vmatprep.subr.bf16.mxu0 0
        %1393 = vmatpush1.bf16.msra.mxu0 0
        %1394 = vmatprep.subr.bf16.mxu0 0
        %1395 = vmatpush1.bf16.msra.mxu0 0
        %1396 = vmatprep.subr.bf16.mxu0 0
        %1397 = vmatpush1.bf16.msra.mxu0 0
        %1398 = vmatprep.subr.bf16.mxu0 0
        %1399 = vmatpush1.bf16.msra.mxu0 0
        %1400 = vmatprep.subr.bf16.mxu0 0
        %1401 = vmatpush1.bf16.msra.mxu0 0
        %1402 = vmatprep.subr.bf16.mxu0 0
        %1403 = vmatpush1.bf16.msra.mxu0 0
        %1404 = vmatprep.subr.bf16.mxu0 0
        %1405 = vmatpush1.bf16.msra.mxu0 0
        %1406 = vmatprep.subr.bf16.mxu0 0
        %1407 = vmatpush1.bf16.msra.mxu0 0
        %1408 = vmatprep.subr.bf16.mxu0 0
        %1409 = vmatpush1.bf16.msra.mxu0 0
        %1410 = vmatprep.subr.bf16.mxu0 0
        %1411 = vmatpush1.bf16.msra.mxu0 0
        %1412 = vmatprep.subr.bf16.mxu0 0
        %1413 = vmatpush1.bf16.msra.mxu0 0
        %1414 = vmatprep.mubr.bf16.mxu0 0
        %1415 = vmatmul.mubr.bf16.gmra.mrb[0].mxu0 %v1380
        %v1416 = vpop.f32.mrb[0].mxu0
        %v1417 = vadd.f32 0.0, %v1416
        %v1418 = vpop.f32.mrb[0].mxu0
        %v1419 = vpop.f32.mrb[0].mxu0
        %v1420 = vadd.f32 0.0, %v1419
        %v1421 = vpop.f32.mrb[0].mxu0
        %1422 = vdwg.mxu0
        %1427 = vrot.lane.b32.xlu0 %v1369, 16
        %v1428 = vpop.permute.xlu0 %1427
        %1429 = vrot.lane.b32.xlu0 %v1372, 16
        %v1430 = vpop.permute.xlu0 %1429
        %1431 = vrot.lane.b32.xlu0 %v1417, 16
        %v1432 = vpop.permute.xlu0 %1431
        %1433 = vrot.lane.b32.xlu0 %v1420, 16
        %v1434 = vpop.permute.xlu0 %1433
        %vm1439 = vcmask 261248
        %1440 = vst.msk [vmem:[#allocation2] sm:$0xff] %vm1439, %v1428
        %1441 = vst.msk [vmem:[#allocation2 + $0x8] sm:$0xff] %vm1439, %v1430
        %1442 = vst.msk [vmem:[#allocation2 + $0x10] sm:$0xff] %vm1439, %v1432
        %1443 = vst.msk [vmem:[#allocation2 + $0x18] sm:$0xff] %vm1439, %v1434
        %1444 = vrot.lane.b32.xlu0 %v936, 96
        %v1445 = vpop.permute.xlu0 %1444
        %1446 = vrot.lane.b32.xlu0 %v938, 96
        %v1447 = vpop.permute.xlu0 %1446
        %v1449 = vsel %vm942, %v1445, 0
        %v1452 = vsel %vm942, %v1447, 0
        %1454 = vmatprep.subr.bf16.mxu0 0
        %1455 = vmatpush1.bf16.xpose.msra.mxu0 %v1452
        %1456 = vmatprep.subr.bf16.mxu0 0
        %1457 = vmatpush1.bf16.xpose.msra.mxu0 0
        %1458 = vmatprep.subr.bf16.mxu0 0
        %1459 = vmatpush1.bf16.xpose.msra.mxu0 0
        %1460 = vmatprep.subr.bf16.mxu0 0
        %1461 = vmatpush1.bf16.xpose.msra.mxu0 0
        %1462 = vmatprep.subr.bf16.mxu0 0
        %1463 = vmatpush1.bf16.xpose.msra.mxu0 0
        %1464 = vmatprep.subr.bf16.mxu0 0
        %1465 = vmatpush1.bf16.xpose.msra.mxu0 0
        %1466 = vmatprep.subr.bf16.mxu0 0
        %1467 = vmatpush1.bf16.xpose.msra.mxu0 0
        %1468 = vmatprep.subr.bf16.mxu0 0
        %1469 = vmatpush1.bf16.xpose.msra.mxu0 0
        %1470 = vmatprep.subr.bf16.mxu0 0
        %1471 = vmatpush1.bf16.xpose.msra.mxu0 0
        %1472 = vmatprep.subr.bf16.mxu0 0
        %1473 = vmatpush1.bf16.xpose.msra.mxu0 0
        %1474 = vmatprep.subr.bf16.mxu0 0
        %1475 = vmatpush1.bf16.xpose.msra.mxu0 0
        %1476 = vmatprep.subr.bf16.mxu0 0
        %1477 = vmatpush1.bf16.xpose.msra.mxu0 0
        %1478 = vmatprep.subr.bf16.mxu0 0
        %1479 = vmatpush1.bf16.xpose.msra.mxu0 0
        %1480 = vmatprep.subr.bf16.mxu0 0
        %1481 = vmatpush1.bf16.xpose.msra.mxu0 0
        %1482 = vmatprep.subr.bf16.mxu0 0
        %1483 = vmatpush1.bf16.xpose.msra.mxu0 0
        %1484 = vmatprep.subr.bf16.mxu0 0
        %1485 = vmatpush1.bf16.xpose.msra.mxu0 0
        %1486 = vmatprep.mubr.bf16.mxu0 0
        %1487 = vmatmul.mubr.bf16.gmra.mrb[0].mxu0 %v1449
        %v1488 = vpop.f32.mrb[0].mxu0
        %v1489 = vadd.f32 0.0, %v1488
        %v1490 = vpop.f32.mrb[0].mxu0
        %v1491 = vpop.f32.mrb[0].mxu0
        %v1492 = vadd.f32 0.0, %v1491
        %v1493 = vpop.f32.mrb[0].mxu0
        %1494 = vdwg.mxu0
        %1495 = vrot.lane.b32.xlu0 %v937, 96
        %v1496 = vpop.permute.xlu0 %1495
        %1497 = vrot.lane.b32.xlu0 %v939, 96
        %v1498 = vpop.permute.xlu0 %1497
        %v1500 = vsel %vm942, %v1496, 0
        %v1503 = vsel %vm942, %v1498, 0
        %1505 = vmatprep.subr.bf16.mxu0 0
        %1506 = vmatpush1.bf16.xpose.msra.mxu0 %v1503
        %1507 = vmatprep.subr.bf16.mxu0 0
        %1508 = vmatpush1.bf16.xpose.msra.mxu0 0
        %1509 = vmatprep.subr.bf16.mxu0 0
        %1510 = vmatpush1.bf16.xpose.msra.mxu0 0
        %1511 = vmatprep.subr.bf16.mxu0 0
        %1512 = vmatpush1.bf16.xpose.msra.mxu0 0
        %1513 = vmatprep.subr.bf16.mxu0 0
        %1514 = vmatpush1.bf16.xpose.msra.mxu0 0
        %1515 = vmatprep.subr.bf16.mxu0 0
        %1516 = vmatpush1.bf16.xpose.msra.mxu0 0
        %1517 = vmatprep.subr.bf16.mxu0 0
        %1518 = vmatpush1.bf16.xpose.msra.mxu0 0
        %1519 = vmatprep.subr.bf16.mxu0 0
        %1520 = vmatpush1.bf16.xpose.msra.mxu0 0
        %1521 = vmatprep.subr.bf16.mxu0 0
        %1522 = vmatpush1.bf16.xpose.msra.mxu0 0
        %1523 = vmatprep.subr.bf16.mxu0 0
        %1524 = vmatpush1.bf16.xpose.msra.mxu0 0
        %1525 = vmatprep.subr.bf16.mxu0 0
        %1526 = vmatpush1.bf16.xpose.msra.mxu0 0
        %1527 = vmatprep.subr.bf16.mxu0 0
        %1528 = vmatpush1.bf16.xpose.msra.mxu0 0
        %1529 = vmatprep.subr.bf16.mxu0 0
        %1530 = vmatpush1.bf16.xpose.msra.mxu0 0
        %1531 = vmatprep.subr.bf16.mxu0 0
        %1532 = vmatpush1.bf16.xpose.msra.mxu0 0
        %1533 = vmatprep.subr.bf16.mxu0 0
        %1534 = vmatpush1.bf16.xpose.msra.mxu0 0
        %1535 = vmatprep.subr.bf16.mxu0 0
        %1536 = vmatpush1.bf16.xpose.msra.mxu0 0
        %1537 = vmatprep.mubr.bf16.mxu0 0
        %1538 = vmatmul.mubr.bf16.gmra.mrb[0].mxu0 %v1500
        %v1539 = vpop.f32.mrb[0].mxu0
        %v1540 = vadd.f32 0.0, %v1539
        %v1541 = vpop.f32.mrb[0].mxu0
        %v1542 = vpop.f32.mrb[0].mxu0
        %v1543 = vadd.f32 0.0, %v1542
        %v1544 = vpop.f32.mrb[0].mxu0
        %1545 = vdwg.mxu0
        %v1546 = vsel %vm942, %v1489, -inf
        %1547 = vmax.xlane.f32.xlu0 %v1546
        %v1548 = vpop.xlane.xlu0 %1547
        %v1549 = vsel %vm942, %v1492, -inf
        %1550 = vmax.xlane.f32.xlu0 %v1549
        %v1551 = vpop.xlane.xlu0 %1550
        %v1552 = vsel %vm942, %v1540, -inf
        %1553 = vmax.xlane.f32.xlu0 %v1552
        %v1554 = vpop.xlane.xlu0 %1553
        %v1555 = vsel %vm942, %v1543, -inf
        %1556 = vmax.xlane.f32.xlu0 %v1555
        %v1557 = vpop.xlane.xlu0 %1556
        %v1558 = vsub.f32 %v1489, %v1548
        %v1559 = vsub.f32 %v1492, %v1551
        %v1560 = vsub.f32 %v1540, %v1554
        %v1561 = vsub.f32 %v1543, %v1557
        %v1562 = vmul.f32 %v1558, 1.442695
        %v1563 = vpow.pop %v1562
        %v1564 = vmul.f32 %v1559, 1.442695
        %v1565 = vpow.pop %v1564
        %v1566 = vmul.f32 %v1560, 1.442695
        %v1567 = vpow.pop %v1566
        %v1568 = vmul.f32 %v1561, 1.442695
        %v1569 = vpow.pop %v1568
        %v1570 = vsel %vm942, %v1563, 0.0
        %1571 = vadd.xlane.f32.xlu0 %v1570
        %v1572 = vpop.xlane.xlu0 %1571
        %v1573 = vsel %vm942, %v1565, 0.0
        %1574 = vadd.xlane.f32.xlu0 %v1573
        %v1575 = vpop.xlane.xlu0 %1574
        %v1576 = vsel %vm942, %v1567, 0.0
        %1577 = vadd.xlane.f32.xlu0 %v1576
        %v1578 = vpop.xlane.xlu0 %1577
        %v1579 = vsel %vm942, %v1569, 0.0
        %1580 = vadd.xlane.f32.xlu0 %v1579
        %v1581 = vpop.xlane.xlu0 %1580
        %v1582 = vrcp.pop %v1572
        %v1583 = vrcp.pop %v1575
        %v1584 = vrcp.pop %v1578
        %v1585 = vrcp.pop %v1581
        %v1586 = vmul.f32 %v1563, %v1582
        %v1587 = vmul.f32 %v1565, %v1583
        %v1588 = vmul.f32 %v1567, %v1584
        %v1589 = vmul.f32 %v1569, %v1585
        %v1590 = vpack.c.bf16 %v1587, %v1586
        %v1591 = vpack.c.bf16 %v1589, %v1588
        %1592 = vrot.lane.b32.xlu0 %v940, 96
        %v1593 = vpop.permute.xlu0 %1592
        %v1596 = vsel %vm942, %v1590, 0
        %1598 = vmatprep.subr.bf16.mxu0 0
        %1599 = vmatpush1.bf16.msra.mxu0 %v1593
        %1600 = vmatprep.subr.bf16.mxu0 0
        %1601 = vmatpush1.bf16.msra.mxu0 0
        %1602 = vmatprep.subr.bf16.mxu0 0
        %1603 = vmatpush1.bf16.msra.mxu0 0
        %1604 = vmatprep.subr.bf16.mxu0 0
        %1605 = vmatpush1.bf16.msra.mxu0 0
        %1606 = vmatprep.subr.bf16.mxu0 0
        %1607 = vmatpush1.bf16.msra.mxu0 0
        %1608 = vmatprep.subr.bf16.mxu0 0
        %1609 = vmatpush1.bf16.msra.mxu0 0
        %1610 = vmatprep.subr.bf16.mxu0 0
        %1611 = vmatpush1.bf16.msra.mxu0 0
        %1612 = vmatprep.subr.bf16.mxu0 0
        %1613 = vmatpush1.bf16.msra.mxu0 0
        %1614 = vmatprep.subr.bf16.mxu0 0
        %1615 = vmatpush1.bf16.msra.mxu0 0
        %1616 = vmatprep.subr.bf16.mxu0 0
        %1617 = vmatpush1.bf16.msra.mxu0 0
        %1618 = vmatprep.subr.bf16.mxu0 0
        %1619 = vmatpush1.bf16.msra.mxu0 0
        %1620 = vmatprep.subr.bf16.mxu0 0
        %1621 = vmatpush1.bf16.msra.mxu0 0
        %1622 = vmatprep.subr.bf16.mxu0 0
        %1623 = vmatpush1.bf16.msra.mxu0 0
        %1624 = vmatprep.subr.bf16.mxu0 0
        %1625 = vmatpush1.bf16.msra.mxu0 0
        %1626 = vmatprep.subr.bf16.mxu0 0
        %1627 = vmatpush1.bf16.msra.mxu0 0
        %1628 = vmatprep.subr.bf16.mxu0 0
        %1629 = vmatpush1.bf16.msra.mxu0 0
        %1630 = vmatprep.mubr.bf16.mxu0 0
        %1631 = vmatmul.mubr.bf16.gmra.mrb[0].mxu0 %v1596
        %v1632 = vpop.f32.mrb[0].mxu0
        %v1633 = vadd.f32 0.0, %v1632
        %v1634 = vpop.f32.mrb[0].mxu0
        %v1635 = vpop.f32.mrb[0].mxu0
        %v1636 = vadd.f32 0.0, %v1635
        %v1637 = vpop.f32.mrb[0].mxu0
        %1638 = vdwg.mxu0
        %1639 = vrot.lane.b32.xlu0 %v941, 96
        %v1640 = vpop.permute.xlu0 %1639
        %v1643 = vsel %vm942, %v1591, 0
        %1645 = vmatprep.subr.bf16.mxu0 0
        %1646 = vmatpush1.bf16.msra.mxu0 %v1640
        %1647 = vmatprep.subr.bf16.mxu0 0
        %1648 = vmatpush1.bf16.msra.mxu0 0
        %1649 = vmatprep.subr.bf16.mxu0 0
        %1650 = vmatpush1.bf16.msra.mxu0 0
        %1651 = vmatprep.subr.bf16.mxu0 0
        %1652 = vmatpush1.bf16.msra.mxu0 0
        %1653 = vmatprep.subr.bf16.mxu0 0
        %1654 = vmatpush1.bf16.msra.mxu0 0
        %1655 = vmatprep.subr.bf16.mxu0 0
        %1656 = vmatpush1.bf16.msra.mxu0 0
        %1657 = vmatprep.subr.bf16.mxu0 0
        %1658 = vmatpush1.bf16.msra.mxu0 0
        %1659 = vmatprep.subr.bf16.mxu0 0
        %1660 = vmatpush1.bf16.msra.mxu0 0
        %1661 = vmatprep.subr.bf16.mxu0 0
        %1662 = vmatpush1.bf16.msra.mxu0 0
        %1663 = vmatprep.subr.bf16.mxu0 0
        %1664 = vmatpush1.bf16.msra.mxu0 0
        %1665 = vmatprep.subr.bf16.mxu0 0
        %1666 = vmatpush1.bf16.msra.mxu0 0
        %1667 = vmatprep.subr.bf16.mxu0 0
        %1668 = vmatpush1.bf16.msra.mxu0 0
        %1669 = vmatprep.subr.bf16.mxu0 0
        %1670 = vmatpush1.bf16.msra.mxu0 0
        %1671 = vmatprep.subr.bf16.mxu0 0
        %1672 = vmatpush1.bf16.msra.mxu0 0
        %1673 = vmatprep.subr.bf16.mxu0 0
        %1674 = vmatpush1.bf16.msra.mxu0 0
        %1675 = vmatprep.subr.bf16.mxu0 0
        %1676 = vmatpush1.bf16.msra.mxu0 0
        %1677 = vmatprep.mubr.bf16.mxu0 0
        %1678 = vmatmul.mubr.bf16.gmra.mrb[0].mxu0 %v1643
        %v1679 = vpop.f32.mrb[0].mxu0
        %v1680 = vadd.f32 0.0, %v1679
        %v1681 = vpop.f32.mrb[0].mxu0
        %v1682 = vpop.f32.mrb[0].mxu0
        %v1683 = vadd.f32 0.0, %v1682
        %v1684 = vpop.f32.mrb[0].mxu0
        %1685 = vdwg.mxu0
        %1690 = vrot.lane.b32.xlu0 %v1633, 32
        %v1691 = vpop.permute.xlu0 %1690
        %1692 = vrot.lane.b32.xlu0 %v1636, 32
        %v1693 = vpop.permute.xlu0 %1692
        %1694 = vrot.lane.b32.xlu0 %v1680, 32
        %v1695 = vpop.permute.xlu0 %1694
        %1696 = vrot.lane.b32.xlu0 %v1683, 32
        %v1697 = vpop.permute.xlu0 %1696
        %vm1702 = vcmask 392448
        %1703 = vst.msk [vmem:[#allocation2] sm:$0xff] %vm1702, %v1691
        %1704 = vst.msk [vmem:[#allocation2 + $0x8] sm:$0xff] %vm1702, %v1693
        %1705 = vst.msk [vmem:[#allocation2 + $0x10] sm:$0xff] %vm1702, %v1695
        %1706 = vst.msk [vmem:[#allocation2 + $0x18] sm:$0xff] %vm1702, %v1697
        %1707 = vrot.lane.b32.xlu0 %v936, 80
        %v1708 = vpop.permute.xlu0 %1707
        %1709 = vrot.lane.b32.xlu0 %v938, 80
        %v1710 = vpop.permute.xlu0 %1709
        %v1712 = vsel %vm942, %v1708, 0
        %v1715 = vsel %vm942, %v1710, 0
        %1717 = vmatprep.subr.bf16.mxu0 0
        %1718 = vmatpush1.bf16.xpose.msra.mxu0 %v1715
        %1719 = vmatprep.subr.bf16.mxu0 0
        %1720 = vmatpush1.bf16.xpose.msra.mxu0 0
        %1721 = vmatprep.subr.bf16.mxu0 0
        %1722 = vmatpush1.bf16.xpose.msra.mxu0 0
        %1723 = vmatprep.subr.bf16.mxu0 0
        %1724 = vmatpush1.bf16.xpose.msra.mxu0 0
        %1725 = vmatprep.subr.bf16.mxu0 0
        %1726 = vmatpush1.bf16.xpose.msra.mxu0 0
        %1727 = vmatprep.subr.bf16.mxu0 0
        %1728 = vmatpush1.bf16.xpose.msra.mxu0 0
        %1729 = vmatprep.subr.bf16.mxu0 0
        %1730 = vmatpush1.bf16.xpose.msra.mxu0 0
        %1731 = vmatprep.subr.bf16.mxu0 0
        %1732 = vmatpush1.bf16.xpose.msra.mxu0 0
        %1733 = vmatprep.subr.bf16.mxu0 0
        %1734 = vmatpush1.bf16.xpose.msra.mxu0 0
        %1735 = vmatprep.subr.bf16.mxu0 0
        %1736 = vmatpush1.bf16.xpose.msra.mxu0 0
        %1737 = vmatprep.subr.bf16.mxu0 0
        %1738 = vmatpush1.bf16.xpose.msra.mxu0 0
        %1739 = vmatprep.subr.bf16.mxu0 0
        %1740 = vmatpush1.bf16.xpose.msra.mxu0 0
        %1741 = vmatprep.subr.bf16.mxu0 0
        %1742 = vmatpush1.bf16.xpose.msra.mxu0 0
        %1743 = vmatprep.subr.bf16.mxu0 0
        %1744 = vmatpush1.bf16.xpose.msra.mxu0 0
        %1745 = vmatprep.subr.bf16.mxu0 0
        %1746 = vmatpush1.bf16.xpose.msra.mxu0 0
        %1747 = vmatprep.subr.bf16.mxu0 0
        %1748 = vmatpush1.bf16.xpose.msra.mxu0 0
        %1749 = vmatprep.mubr.bf16.mxu0 0
        %1750 = vmatmul.mubr.bf16.gmra.mrb[0].mxu0 %v1712
        %v1751 = vpop.f32.mrb[0].mxu0
        %v1752 = vadd.f32 0.0, %v1751
        %v1753 = vpop.f32.mrb[0].mxu0
        %v1754 = vpop.f32.mrb[0].mxu0
        %v1755 = vadd.f32 0.0, %v1754
        %v1756 = vpop.f32.mrb[0].mxu0
        %1757 = vdwg.mxu0
        %1758 = vrot.lane.b32.xlu0 %v937, 80
        %v1759 = vpop.permute.xlu0 %1758
        %1760 = vrot.lane.b32.xlu0 %v939, 80
        %v1761 = vpop.permute.xlu0 %1760
        %v1763 = vsel %vm942, %v1759, 0
        %v1766 = vsel %vm942, %v1761, 0
        %1768 = vmatprep.subr.bf16.mxu0 0
        %1769 = vmatpush1.bf16.xpose.msra.mxu0 %v1766
        %1770 = vmatprep.subr.bf16.mxu0 0
        %1771 = vmatpush1.bf16.xpose.msra.mxu0 0
        %1772 = vmatprep.subr.bf16.mxu0 0
        %1773 = vmatpush1.bf16.xpose.msra.mxu0 0
        %1774 = vmatprep.subr.bf16.mxu0 0
        %1775 = vmatpush1.bf16.xpose.msra.mxu0 0
        %1776 = vmatprep.subr.bf16.mxu0 0
        %1777 = vmatpush1.bf16.xpose.msra.mxu0 0
        %1778 = vmatprep.subr.bf16.mxu0 0
        %1779 = vmatpush1.bf16.xpose.msra.mxu0 0
        %1780 = vmatprep.subr.bf16.mxu0 0
        %1781 = vmatpush1.bf16.xpose.msra.mxu0 0
        %1782 = vmatprep.subr.bf16.mxu0 0
        %1783 = vmatpush1.bf16.xpose.msra.mxu0 0
        %1784 = vmatprep.subr.bf16.mxu0 0
        %1785 = vmatpush1.bf16.xpose.msra.mxu0 0
        %1786 = vmatprep.subr.bf16.mxu0 0
        %1787 = vmatpush1.bf16.xpose.msra.mxu0 0
        %1788 = vmatprep.subr.bf16.mxu0 0
        %1789 = vmatpush1.bf16.xpose.msra.mxu0 0
        %1790 = vmatprep.subr.bf16.mxu0 0
        %1791 = vmatpush1.bf16.xpose.msra.mxu0 0
        %1792 = vmatprep.subr.bf16.mxu0 0
        %1793 = vmatpush1.bf16.xpose.msra.mxu0 0
        %1794 = vmatprep.subr.bf16.mxu0 0
        %1795 = vmatpush1.bf16.xpose.msra.mxu0 0
        %1796 = vmatprep.subr.bf16.mxu0 0
        %1797 = vmatpush1.bf16.xpose.msra.mxu0 0
        %1798 = vmatprep.subr.bf16.mxu0 0
        %1799 = vmatpush1.bf16.xpose.msra.mxu0 0
        %1800 = vmatprep.mubr.bf16.mxu0 0
        %1801 = vmatmul.mubr.bf16.gmra.mrb[0].mxu0 %v1763
        %v1802 = vpop.f32.mrb[0].mxu0
        %v1803 = vadd.f32 0.0, %v1802
        %v1804 = vpop.f32.mrb[0].mxu0
        %v1805 = vpop.f32.mrb[0].mxu0
        %v1806 = vadd.f32 0.0, %v1805
        %v1807 = vpop.f32.mrb[0].mxu0
        %1808 = vdwg.mxu0
        %v1809 = vsel %vm942, %v1752, -inf
        %1810 = vmax.xlane.f32.xlu0 %v1809
        %v1811 = vpop.xlane.xlu0 %1810
        %v1812 = vsel %vm942, %v1755, -inf
        %1813 = vmax.xlane.f32.xlu0 %v1812
        %v1814 = vpop.xlane.xlu0 %1813
        %v1815 = vsel %vm942, %v1803, -inf
        %1816 = vmax.xlane.f32.xlu0 %v1815
        %v1817 = vpop.xlane.xlu0 %1816
        %v1818 = vsel %vm942, %v1806, -inf
        %1819 = vmax.xlane.f32.xlu0 %v1818
        %v1820 = vpop.xlane.xlu0 %1819
        %v1821 = vsub.f32 %v1752, %v1811
        %v1822 = vsub.f32 %v1755, %v1814
        %v1823 = vsub.f32 %v1803, %v1817
        %v1824 = vsub.f32 %v1806, %v1820
        %v1825 = vmul.f32 %v1821, 1.442695
        %v1826 = vpow.pop %v1825
        %v1827 = vmul.f32 %v1822, 1.442695
        %v1828 = vpow.pop %v1827
        %v1829 = vmul.f32 %v1823, 1.442695
        %v1830 = vpow.pop %v1829
        %v1831 = vmul.f32 %v1824, 1.442695
        %v1832 = vpow.pop %v1831
        %v1833 = vsel %vm942, %v1826, 0.0
        %1834 = vadd.xlane.f32.xlu0 %v1833
        %v1835 = vpop.xlane.xlu0 %1834
        %v1836 = vsel %vm942, %v1828, 0.0
        %1837 = vadd.xlane.f32.xlu0 %v1836
        %v1838 = vpop.xlane.xlu0 %1837
        %v1839 = vsel %vm942, %v1830, 0.0
        %1840 = vadd.xlane.f32.xlu0 %v1839
        %v1841 = vpop.xlane.xlu0 %1840
        %v1842 = vsel %vm942, %v1832, 0.0
        %1843 = vadd.xlane.f32.xlu0 %v1842
        %v1844 = vpop.xlane.xlu0 %1843
        %v1845 = vrcp.pop %v1835
        %v1846 = vrcp.pop %v1838
        %v1847 = vrcp.pop %v1841
        %v1848 = vrcp.pop %v1844
        %v1849 = vmul.f32 %v1826, %v1845
        %v1850 = vmul.f32 %v1828, %v1846
        %v1851 = vmul.f32 %v1830, %v1847
        %v1852 = vmul.f32 %v1832, %v1848
        %v1853 = vpack.c.bf16 %v1850, %v1849
        %v1854 = vpack.c.bf16 %v1852, %v1851
        %1855 = vrot.lane.b32.xlu0 %v940, 80
        %v1856 = vpop.permute.xlu0 %1855
        %v1859 = vsel %vm942, %v1853, 0
        %1861 = vmatprep.subr.bf16.mxu0 0
        %1862 = vmatpush1.bf16.msra.mxu0 %v1856
        %1863 = vmatprep.subr.bf16.mxu0 0
        %1864 = vmatpush1.bf16.msra.mxu0 0
        %1865 = vmatprep.subr.bf16.mxu0 0
        %1866 = vmatpush1.bf16.msra.mxu0 0
        %1867 = vmatprep.subr.bf16.mxu0 0
        %1868 = vmatpush1.bf16.msra.mxu0 0
        %1869 = vmatprep.subr.bf16.mxu0 0
        %1870 = vmatpush1.bf16.msra.mxu0 0
        %1871 = vmatprep.subr.bf16.mxu0 0
        %1872 = vmatpush1.bf16.msra.mxu0 0
        %1873 = vmatprep.subr.bf16.mxu0 0
        %1874 = vmatpush1.bf16.msra.mxu0 0
        %1875 = vmatprep.subr.bf16.mxu0 0
        %1876 = vmatpush1.bf16.msra.mxu0 0
        %1877 = vmatprep.subr.bf16.mxu0 0
        %1878 = vmatpush1.bf16.msra.mxu0 0
        %1879 = vmatprep.subr.bf16.mxu0 0
        %1880 = vmatpush1.bf16.msra.mxu0 0
        %1881 = vmatprep.subr.bf16.mxu0 0
        %1882 = vmatpush1.bf16.msra.mxu0 0
        %1883 = vmatprep.subr.bf16.mxu0 0
        %1884 = vmatpush1.bf16.msra.mxu0 0
        %1885 = vmatprep.subr.bf16.mxu0 0
        %1886 = vmatpush1.bf16.msra.mxu0 0
        %1887 = vmatprep.subr.bf16.mxu0 0
        %1888 = vmatpush1.bf16.msra.mxu0 0
        %1889 = vmatprep.subr.bf16.mxu0 0
        %1890 = vmatpush1.bf16.msra.mxu0 0
        %1891 = vmatprep.subr.bf16.mxu0 0
        %1892 = vmatpush1.bf16.msra.mxu0 0
        %1893 = vmatprep.mubr.bf16.mxu0 0
        %1894 = vmatmul.mubr.bf16.gmra.mrb[0].mxu0 %v1859
        %v1895 = vpop.f32.mrb[0].mxu0
        %v1896 = vadd.f32 0.0, %v1895
        %v1897 = vpop.f32.mrb[0].mxu0
        %v1898 = vpop.f32.mrb[0].mxu0
        %v1899 = vadd.f32 0.0, %v1898
        %v1900 = vpop.f32.mrb[0].mxu0
        %1901 = vdwg.mxu0
        %1902 = vrot.lane.b32.xlu0 %v941, 80
        %v1903 = vpop.permute.xlu0 %1902
        %v1906 = vsel %vm942, %v1854, 0
        %1908 = vmatprep.subr.bf16.mxu0 0
        %1909 = vmatpush1.bf16.msra.mxu0 %v1903
        %1910 = vmatprep.subr.bf16.mxu0 0
        %1911 = vmatpush1.bf16.msra.mxu0 0
        %1912 = vmatprep.subr.bf16.mxu0 0
        %1913 = vmatpush1.bf16.msra.mxu0 0
        %1914 = vmatprep.subr.bf16.mxu0 0
        %1915 = vmatpush1.bf16.msra.mxu0 0
        %1916 = vmatprep.subr.bf16.mxu0 0
        %1917 = vmatpush1.bf16.msra.mxu0 0
        %1918 = vmatprep.subr.bf16.mxu0 0
        %1919 = vmatpush1.bf16.msra.mxu0 0
        %1920 = vmatprep.subr.bf16.mxu0 0
        %1921 = vmatpush1.bf16.msra.mxu0 0
        %1922 = vmatprep.subr.bf16.mxu0 0
        %1923 = vmatpush1.bf16.msra.mxu0 0
        %1924 = vmatprep.subr.bf16.mxu0 0
        %1925 = vmatpush1.bf16.msra.mxu0 0
        %1926 = vmatprep.subr.bf16.mxu0 0
        %1927 = vmatpush1.bf16.msra.mxu0 0
        %1928 = vmatprep.subr.bf16.mxu0 0
        %1929 = vmatpush1.bf16.msra.mxu0 0
        %1930 = vmatprep.subr.bf16.mxu0 0
        %1931 = vmatpush1.bf16.msra.mxu0 0
        %1932 = vmatprep.subr.bf16.mxu0 0
        %1933 = vmatpush1.bf16.msra.mxu0 0
        %1934 = vmatprep.subr.bf16.mxu0 0
        %1935 = vmatpush1.bf16.msra.mxu0 0
        %1936 = vmatprep.subr.bf16.mxu0 0
        %1937 = vmatpush1.bf16.msra.mxu0 0
        %1938 = vmatprep.subr.bf16.mxu0 0
        %1939 = vmatpush1.bf16.msra.mxu0 0
        %1940 = vmatprep.mubr.bf16.mxu0 0
        %1941 = vmatmul.mubr.bf16.gmra.mrb[0].mxu0 %v1906
        %v1942 = vpop.f32.mrb[0].mxu0
        %v1943 = vadd.f32 0.0, %v1942
        %v1944 = vpop.f32.mrb[0].mxu0
        %v1945 = vpop.f32.mrb[0].mxu0
        %v1946 = vadd.f32 0.0, %v1945
        %v1947 = vpop.f32.mrb[0].mxu0
        %1948 = vdwg.mxu0
        %1953 = vrot.lane.b32.xlu0 %v1896, 48
        %v1954 = vpop.permute.xlu0 %1953
        %1955 = vrot.lane.b32.xlu0 %v1899, 48
        %v1956 = vpop.permute.xlu0 %1955
        %1957 = vrot.lane.b32.xlu0 %v1943, 48
        %v1958 = vpop.permute.xlu0 %1957
        %1959 = vrot.lane.b32.xlu0 %v1946, 48
        %v1960 = vpop.permute.xlu0 %1959
        %vm1965 = vcmask 523648
        %1966 = vst.msk [vmem:[#allocation2] sm:$0xff] %vm1965, %v1954
        %1967 = vst.msk [vmem:[#allocation2 + $0x8] sm:$0xff] %vm1965, %v1956
        %1968 = vst.msk [vmem:[#allocation2 + $0x10] sm:$0xff] %vm1965, %v1958
        %1969 = vst.msk [vmem:[#allocation2 + $0x18] sm:$0xff] %vm1965, %v1960
        %v1970 = vld [vmem:[#allocation2] sm:$0xff]
        %v1971 = vld [vmem:[#allocation2 + $0x8] sm:$0xff]
        %v1972 = vld [vmem:[#allocation2 + $0x10] sm:$0xff]
        %v1973 = vld [vmem:[#allocation2 + $0x18] sm:$0xff]
        %v1974 = vpack.c.bf16 %v1971, %v1970
        %v1975 = vpack.c.bf16 %v1973, %v1972
        %v1976 = vld [vmem:[#allocation6] sm:$0xf]
        %v1977 = vld [vmem:[#allocation6 + $0x4] sm:$0xf]
        %v1978 = vld [vmem:[#allocation6 + $0x8] sm:$0xf]
        %v1979 = vld [vmem:[#allocation6 + $0xc] sm:$0xf]
        %v1980 = vld [vmem:[#allocation6 + $0x10] sm:$0xf]
        %v1981 = vld [vmem:[#allocation6 + $0x14] sm:$0xf]
        %v1982 = vld [vmem:[#allocation6 + $0x18] sm:$0xf]
        %v1983 = vld [vmem:[#allocation6 + $0x1c] sm:$0xf]
        %v1992 = vunpack.c.l.b16 %v1976
        %v1993 = vunpack.c.l.b16 %v1977
        %v1994 = vunpack.c.l.b16 %v1978
        %v1995 = vunpack.c.l.b16 %v1979
        %v1996 = vunpack.c.l.b16 %v1980
        %v1997 = vunpack.c.l.b16 %v1981
        %v1998 = vunpack.c.l.b16 %v1982
        %v1999 = vunpack.c.l.b16 %v1983
        %v2000 = vpack.c.b16 %v1993, %v1992
        %v2001 = vpack.c.b16 %v1995, %v1994
        %v2002 = vpack.c.b16 %v1997, %v1996
        %v2003 = vpack.c.b16 %v1999, %v1998
        %v2009 = vsel %vm590, %v1974, 0
        %v2012 = vsel %vm590, %v1975, 0
        %2014 = vmatprep.subr.bf16.mxu0 0
        %2015 = vmatpush1.bf16.msra.mxu0 %v2000
        %2016 = vmatprep.subr.bf16.mxu0 0
        %2017 = vmatpush1.bf16.msra.mxu0 %v2001
        %2018 = vmatprep.subr.bf16.mxu0 0
        %2019 = vmatpush1.bf16.msra.mxu0 %v2002
        %2020 = vmatprep.subr.bf16.mxu0 0
        %2021 = vmatpush1.bf16.msra.mxu0 %v2003
        %2022 = vmatprep.subr.bf16.mxu0 0
        %2023 = vmatpush1.bf16.msra.mxu0 0
        %2024 = vmatprep.subr.bf16.mxu0 0
        %2025 = vmatpush1.bf16.msra.mxu0 0
        %2026 = vmatprep.subr.bf16.mxu0 0
        %2027 = vmatpush1.bf16.msra.mxu0 0
        %2028 = vmatprep.subr.bf16.mxu0 0
        %2029 = vmatpush1.bf16.msra.mxu0 0
        %2030 = vmatprep.subr.bf16.mxu0 0
        %2031 = vmatpush1.bf16.msra.mxu0 0
        %2032 = vmatprep.subr.bf16.mxu0 0
        %2033 = vmatpush1.bf16.msra.mxu0 0
        %2034 = vmatprep.subr.bf16.mxu0 0
        %2035 = vmatpush1.bf16.msra.mxu0 0
        %2036 = vmatprep.subr.bf16.mxu0 0
        %2037 = vmatpush1.bf16.msra.mxu0 0
        %2038 = vmatprep.subr.bf16.mxu0 0
        %2039 = vmatpush1.bf16.msra.mxu0 0
        %2040 = vmatprep.subr.bf16.mxu0 0
        %2041 = vmatpush1.bf16.msra.mxu0 0
        %2042 = vmatprep.subr.bf16.mxu0 0
        %2043 = vmatpush1.bf16.msra.mxu0 0
        %2044 = vmatprep.subr.bf16.mxu0 0
        %2045 = vmatpush1.bf16.msra.mxu0 0
        %2046 = vmatprep.mubr.bf16.mxu0 0
        %2047 = vmatmul.mubr.bf16.gmra.mrb[0].mxu0 %v2009
        %v2048 = vpop.f32.mrb[0].mxu0
        %v2049 = vadd.f32 0.0, %v2048
        %v2050 = vpop.f32.mrb[0].mxu0
        %v2051 = vpop.f32.mrb[0].mxu0
        %v2052 = vadd.f32 0.0, %v2051
        %v2053 = vpop.f32.mrb[0].mxu0
        %2054 = vmatprep.mubr.bf16.mxu0 0
        %2055 = vmatmul.mubr.bf16.gmra.mrb[0].mxu0 %v2012
        %v2056 = vpop.f32.mrb[0].mxu0
        %v2057 = vadd.f32 0.0, %v2056
        %v2058 = vpop.f32.mrb[0].mxu0
        %v2059 = vpop.f32.mrb[0].mxu0
        %v2060 = vadd.f32 0.0, %v2059
        %v2061 = vpop.f32.mrb[0].mxu0
        %2062 = vdwg.mxu0
        %v2063 = vadd.f32 %v584, %v2049
        %v2064 = vadd.f32 %v585, %v2052
        %v2065 = vadd.f32 %v586, %v2057
        %v2066 = vadd.f32 %v587, %v2060
        %v2067 = vld [vmem:[%s8] sm:$0x1]
        %v2069 = vlaneseq
        %v2070 = vshrl.u32 %v2069, 7
        %v2071 = vsub.s32 0, %v2070
        %v2072 = vrot.slane %v2067, %v2071
        %v2074 = vadd.f32 %v2063, %v2072
        %v2075 = vadd.f32 %v2064, %v2072
        %v2076 = vadd.f32 %v2065, %v2072
        %v2077 = vadd.f32 %v2066, %v2072
        %v2078 = vld [vmem:[%s11] sm:$0x1]
        %v2079 = vld [vmem:[%s12] sm:$0x1]
        %v2080 = vsel %vm590, %v2074, 0.0
        %2081 = vadd.xlane.f32.xlu0 %v2080
        %v2082 = vpop.xlane.xlu0 %2081
        %v2083 = vsel %vm590, %v2075, 0.0
        %2084 = vadd.xlane.f32.xlu0 %v2083
        %v2085 = vpop.xlane.xlu0 %2084
        %v2086 = vsel %vm590, %v2076, 0.0
        %2087 = vadd.xlane.f32.xlu0 %v2086
        %v2088 = vpop.xlane.xlu0 %2087
        %v2089 = vsel %vm590, %v2077, 0.0
        %2090 = vadd.xlane.f32.xlu0 %v2089
        %v2091 = vpop.xlane.xlu0 %2090
        %v2092 = vmul.f32 %v2082, %v603
        %v2093 = vmul.f32 %v2085, %v603
        %v2094 = vmul.f32 %v2088, %v603
        %v2095 = vmul.f32 %v2091, %v603
        %v2096 = vsub.f32 %v2074, %v2092
        %v2097 = vsub.f32 %v2075, %v2093
        %v2098 = vsub.f32 %v2076, %v2094
        %v2099 = vsub.f32 %v2077, %v2095
        %v2100 = vmul.f32 %v2096, %v2096
        %v2101 = vmul.f32 %v2097, %v2097
        %v2102 = vmul.f32 %v2098, %v2098
        %v2103 = vmul.f32 %v2099, %v2099
        %v2104 = vsel %vm590, %v2100, 0.0
        %2105 = vadd.xlane.f32.xlu0 %v2104
        %v2106 = vpop.xlane.xlu0 %2105
        %v2107 = vsel %vm590, %v2101, 0.0
        %2108 = vadd.xlane.f32.xlu0 %v2107
        %v2109 = vpop.xlane.xlu0 %2108
        %v2110 = vsel %vm590, %v2102, 0.0
        %2111 = vadd.xlane.f32.xlu0 %v2110
        %v2112 = vpop.xlane.xlu0 %2111
        %v2113 = vsel %vm590, %v2103, 0.0
        %2114 = vadd.xlane.f32.xlu0 %v2113
        %v2115 = vpop.xlane.xlu0 %2114
        %v2116 = vmul.f32 %v2106, %v603
        %v2117 = vmul.f32 %v2109, %v603
        %v2118 = vmul.f32 %v2112, %v603
        %v2119 = vmul.f32 %v2115, %v603
        %v2120 = vadd.f32 %v2116, 1e-05
        %v2121 = vadd.f32 %v2117, 1e-05
        %v2122 = vadd.f32 %v2118, 1e-05
        %v2123 = vadd.f32 %v2119, 1e-05
        %v2124 = vrsqrt.pop %v2120
        %v2125 = vrsqrt.pop %v2121
        %v2126 = vrsqrt.pop %v2122
        %v2127 = vrsqrt.pop %v2123
        %v2128 = vmul.f32 %v2096, %v2124
        %v2129 = vmul.f32 %v2097, %v2125
        %v2130 = vmul.f32 %v2098, %v2126
        %v2131 = vmul.f32 %v2099, %v2127
        %v2133 = vlaneseq
        %v2134 = vshrl.u32 %v2133, 7
        %v2135 = vsub.s32 0, %v2134
        %v2136 = vrot.slane %v2078, %v2135
        %v2138 = vmul.f32 %v2128, %v2136
        %v2139 = vmul.f32 %v2129, %v2136
        %v2140 = vmul.f32 %v2130, %v2136
        %v2141 = vmul.f32 %v2131, %v2136
        %v2143 = vlaneseq
        %v2144 = vshrl.u32 %v2143, 7
        %v2145 = vsub.s32 0, %v2144
        %v2146 = vrot.slane %v2079, %v2145
        %v2148 = vadd.f32 %v2138, %v2146
        %v2149 = vadd.f32 %v2139, %v2146
        %v2150 = vadd.f32 %v2140, %v2146
        %v2151 = vadd.f32 %v2141, %v2146
        %v2152 = vpack.c.bf16 %v2149, %v2148
        %v2153 = vpack.c.bf16 %v2151, %v2150
        %v2154 = vld [vmem:[%s13] sm:$0xff]
        %v2155 = vld [vmem:[%s13 + $0x8] sm:$0xff]
        %v2156 = vld [vmem:[%s13 + $0x10] sm:$0xff]
        %v2157 = vld [vmem:[%s13 + $0x18] sm:$0xff]
        %v2158 = vld [vmem:[%s13 + $0x20] sm:$0xff]
        %v2159 = vld [vmem:[%s13 + $0x28] sm:$0xff]
        %v2160 = vld [vmem:[%s13 + $0x30] sm:$0xff]
        %v2161 = vld [vmem:[%s13 + $0x38] sm:$0xff]
        %v2162 = vld [vmem:[%s14] sm:$0x3]
        %v2164 = vlaneseq
        %v2165 = vshrl.u32 %v2164, 7
        %v2166 = vsub.s32 0, %v2165
        %v2167 = vrot.slane %v2162, %v2166
        %v2168 = vlaneseq
        %v2169 = vshrl.u32 %v2168, 7
        %v2170 = vsub.s32 1, %v2169
        %v2171 = vrot.slane %v2162, %v2170
        %v2182 = vunpack.c.l.b16 %v2154
        %v2183 = vunpack.c.h.b16 %v2154
        %v2184 = vunpack.c.l.b16 %v2155
        %v2185 = vunpack.c.h.b16 %v2155
        %v2186 = vunpack.c.l.b16 %v2156
        %v2187 = vunpack.c.h.b16 %v2156
        %v2188 = vunpack.c.l.b16 %v2157
        %v2189 = vunpack.c.h.b16 %v2157
        %v2190 = vunpack.c.l.b16 %v2158
        %v2191 = vunpack.c.h.b16 %v2158
        %v2192 = vunpack.c.l.b16 %v2159
        %v2193 = vunpack.c.h.b16 %v2159
        %v2194 = vunpack.c.l.b16 %v2160
        %v2195 = vunpack.c.h.b16 %v2160
        %v2196 = vunpack.c.l.b16 %v2161
        %v2197 = vunpack.c.h.b16 %v2161
        %v2198 = vpack.c.b16 %v2184, %v2182
        %v2199 = vpack.c.b16 %v2185, %v2183
        %v2200 = vpack.c.b16 %v2188, %v2186
        %v2201 = vpack.c.b16 %v2189, %v2187
        %v2202 = vpack.c.b16 %v2192, %v2190
        %v2203 = vpack.c.b16 %v2193, %v2191
        %v2204 = vpack.c.b16 %v2196, %v2194
        %v2205 = vpack.c.b16 %v2197, %v2195
        %v2215 = vsel %vm590, %v2152, 0
        %v2218 = vsel %vm590, %v2153, 0
        %2220 = vmatprep.subr.bf16.mxu0 %v2199
        %2221 = vmatpush1.bf16.msra.mxu0 %v2198
        %2222 = vmatprep.subr.bf16.mxu0 %v2201
        %2223 = vmatpush1.bf16.msra.mxu0 %v2200
        %2224 = vmatprep.subr.bf16.mxu0 %v2203
        %2225 = vmatpush1.bf16.msra.mxu0 %v2202
        %2226 = vmatprep.subr.bf16.mxu0 %v2205
        %2227 = vmatpush1.bf16.msra.mxu0 %v2204
        %2228 = vmatprep.subr.bf16.mxu0 0
        %2229 = vmatpush1.bf16.msra.mxu0 0
        %2230 = vmatprep.subr.bf16.mxu0 0
        %2231 = vmatpush1.bf16.msra.mxu0 0
        %2232 = vmatprep.subr.bf16.mxu0 0
        %2233 = vmatpush1.bf16.msra.mxu0 0
        %2234 = vmatprep.subr.bf16.mxu0 0
        %2235 = vmatpush1.bf16.msra.mxu0 0
        %2236 = vmatprep.subr.bf16.mxu0 0
        %2237 = vmatpush1.bf16.msra.mxu0 0
        %2238 = vmatprep.subr.bf16.mxu0 0
        %2239 = vmatpush1.bf16.msra.mxu0 0
        %2240 = vmatprep.subr.bf16.mxu0 0
        %2241 = vmatpush1.bf16.msra.mxu0 0
        %2242 = vmatprep.subr.bf16.mxu0 0
        %2243 = vmatpush1.bf16.msra.mxu0 0
        %2244 = vmatprep.subr.bf16.mxu0 0
        %2245 = vmatpush1.bf16.msra.mxu0 0
        %2246 = vmatprep.subr.bf16.mxu0 0
        %2247 = vmatpush1.bf16.msra.mxu0 0
        %2248 = vmatprep.subr.bf16.mxu0 0
        %2249 = vmatpush1.bf16.msra.mxu0 0
        %2250 = vmatprep.subr.bf16.mxu0 0
        %2251 = vmatpush1.bf16.msra.mxu0 0
        %2252 = vmatprep.mubr.bf16.mxu0 0
        %2253 = vmatmul.mubr.bf16.gmra.mrb[0].mxu0 %v2215
        %v2254 = vpop.f32.mrb[0].mxu0
        %v2255 = vadd.f32 %v2167, %v2254
        %v2256 = vpop.f32.mrb[0].mxu0
        %v2257 = vadd.f32 %v2171, %v2256
        %v2258 = vpop.f32.mrb[0].mxu0
        %v2259 = vadd.f32 %v2167, %v2258
        %v2260 = vpop.f32.mrb[0].mxu0
        %v2261 = vadd.f32 %v2171, %v2260
        %2262 = vmatprep.mubr.bf16.mxu0 0
        %2263 = vmatmul.mubr.bf16.gmra.mrb[0].mxu0 %v2218
        %v2264 = vpop.f32.mrb[0].mxu0
        %v2265 = vadd.f32 %v2167, %v2264
        %v2266 = vpop.f32.mrb[0].mxu0
        %v2267 = vadd.f32 %v2171, %v2266
        %v2268 = vpop.f32.mrb[0].mxu0
        %v2269 = vadd.f32 %v2167, %v2268
        %v2270 = vpop.f32.mrb[0].mxu0
        %v2271 = vadd.f32 %v2171, %v2270
        %2272 = vdwg.mxu0
        %v2273 = vmul.f32 %v2255, 1.702
        %v2274 = vmul.f32 %v2257, 1.702
        %v2275 = vmul.f32 %v2259, 1.702
        %v2276 = vmul.f32 %v2261, 1.702
        %v2277 = vmul.f32 %v2265, 1.702
        %v2278 = vmul.f32 %v2267, 1.702
        %v2279 = vmul.f32 %v2269, 1.702
        %v2280 = vmul.f32 %v2271, 1.702
        %v2281 = vxor.u32 %v2273, 2147483648
        %v2282 = vxor.u32 %v2274, 2147483648
        %v2283 = vxor.u32 %v2275, 2147483648
        %v2284 = vxor.u32 %v2276, 2147483648
        %v2285 = vxor.u32 %v2277, 2147483648
        %v2286 = vxor.u32 %v2278, 2147483648
        %v2287 = vxor.u32 %v2279, 2147483648
        %v2288 = vxor.u32 %v2280, 2147483648
        %v2289 = vmul.f32 %v2281, 1.442695
        %v2290 = vpow.pop %v2289
        %v2291 = vmul.f32 %v2282, 1.442695
        %v2292 = vpow.pop %v2291
        %v2293 = vmul.f32 %v2283, 1.442695
        %v2294 = vpow.pop %v2293
        %v2295 = vmul.f32 %v2284, 1.442695
        %v2296 = vpow.pop %v2295
        %v2297 = vmul.f32 %v2285, 1.442695
        %v2298 = vpow.pop %v2297
        %v2299 = vmul.f32 %v2286, 1.442695
        %v2300 = vpow.pop %v2299
        %v2301 = vmul.f32 %v2287, 1.442695
        %v2302 = vpow.pop %v2301
        %v2303 = vmul.f32 %v2288, 1.442695
        %v2304 = vpow.pop %v2303
        %v2305 = vadd.f32 %v2290, 1.0
        %v2306 = vadd.f32 %v2292, 1.0
        %v2307 = vadd.f32 %v2294, 1.0
        %v2308 = vadd.f32 %v2296, 1.0
        %v2309 = vadd.f32 %v2298, 1.0
        %v2310 = vadd.f32 %v2300, 1.0
        %v2311 = vadd.f32 %v2302, 1.0
        %v2312 = vadd.f32 %v2304, 1.0
        %v2313 = vrcp.pop %v2305
        %v2314 = vmul.f32 1.0, %v2313
        %v2315 = vrcp.pop %v2306
        %v2316 = vmul.f32 1.0, %v2315
        %v2317 = vrcp.pop %v2307
        %v2318 = vmul.f32 1.0, %v2317
        %v2319 = vrcp.pop %v2308
        %v2320 = vmul.f32 1.0, %v2319
        %v2321 = vrcp.pop %v2309
        %v2322 = vmul.f32 1.0, %v2321
        %v2323 = vrcp.pop %v2310
        %v2324 = vmul.f32 1.0, %v2323
        %v2325 = vrcp.pop %v2311
        %v2326 = vmul.f32 1.0, %v2325
        %v2327 = vrcp.pop %v2312
        %v2328 = vmul.f32 1.0, %v2327
        %v2329 = vmul.f32 %v2255, %v2314
        %v2330 = vmul.f32 %v2257, %v2316
        %v2331 = vmul.f32 %v2259, %v2318
        %v2332 = vmul.f32 %v2261, %v2320
        %v2333 = vmul.f32 %v2265, %v2322
        %v2334 = vmul.f32 %v2267, %v2324
        %v2335 = vmul.f32 %v2269, %v2326
        %v2336 = vmul.f32 %v2271, %v2328
        %v2337 = vpack.c.bf16 %v2331, %v2329
        %v2338 = vpack.c.bf16 %v2332, %v2330
        %v2339 = vpack.c.bf16 %v2335, %v2333
        %v2340 = vpack.c.bf16 %v2336, %v2334
        %v2341 = vld [vmem:[%s15] sm:$0xf]
        %v2342 = vld [vmem:[%s15 + $0x4] sm:$0xf]
        %v2343 = vld [vmem:[%s15 + $0x8] sm:$0xf]
        %v2344 = vld [vmem:[%s15 + $0xc] sm:$0xf]
        %v2345 = vld [vmem:[%s15 + $0x10] sm:$0xf]
        %v2346 = vld [vmem:[%s15 + $0x14] sm:$0xf]
        %v2347 = vld [vmem:[%s15 + $0x18] sm:$0xf]
        %v2348 = vld [vmem:[%s15 + $0x1c] sm:$0xf]
        %v2349 = vld [vmem:[%s15 + $0x20] sm:$0xf]
        %v2350 = vld [vmem:[%s15 + $0x24] sm:$0xf]
        %v2351 = vld [vmem:[%s15 + $0x28] sm:$0xf]
        %v2352 = vld [vmem:[%s15 + $0x2c] sm:$0xf]
        %v2353 = vld [vmem:[%s15 + $0x30] sm:$0xf]
        %v2354 = vld [vmem:[%s15 + $0x34] sm:$0xf]
        %v2355 = vld [vmem:[%s15 + $0x38] sm:$0xf]
        %v2356 = vld [vmem:[%s15 + $0x3c] sm:$0xf]
        %v2357 = vld [vmem:[%s15 + $0x40] sm:$0xf]
        %v2358 = vld [vmem:[%s15 + $0x44] sm:$0xf]
        %v2359 = vld [vmem:[%s15 + $0x48] sm:$0xf]
        %v2360 = vld [vmem:[%s15 + $0x4c] sm:$0xf]
        %v2361 = vld [vmem:[%s15 + $0x50] sm:$0xf]
        %v2362 = vld [vmem:[%s15 + $0x54] sm:$0xf]
        %v2363 = vld [vmem:[%s15 + $0x58] sm:$0xf]
        %v2364 = vld [vmem:[%s15 + $0x5c] sm:$0xf]
        %v2365 = vld [vmem:[%s15 + $0x60] sm:$0xf]
        %v2366 = vld [vmem:[%s15 + $0x64] sm:$0xf]
        %v2367 = vld [vmem:[%s15 + $0x68] sm:$0xf]
        %v2368 = vld [vmem:[%s15 + $0x6c] sm:$0xf]
        %v2369 = vld [vmem:[%s15 + $0x70] sm:$0xf]
        %v2370 = vld [vmem:[%s15 + $0x74] sm:$0xf]
        %v2371 = vld [vmem:[%s15 + $0x78] sm:$0xf]
        %v2372 = vld [vmem:[%s15 + $0x7c] sm:$0xf]
        %v2373 = vld [vmem:[%s16] sm:$0x1]
        %v2375 = vlaneseq
        %v2376 = vshrl.u32 %v2375, 7
        %v2377 = vsub.s32 0, %v2376
        %v2378 = vrot.slane %v2373, %v2377
        %v2412 = vunpack.c.l.b16 %v2341
        %v2413 = vunpack.c.l.b16 %v2342
        %v2414 = vunpack.c.l.b16 %v2343
        %v2415 = vunpack.c.l.b16 %v2344
        %v2416 = vunpack.c.l.b16 %v2345
        %v2417 = vunpack.c.l.b16 %v2346
        %v2418 = vunpack.c.l.b16 %v2347
        %v2419 = vunpack.c.l.b16 %v2348
        %v2420 = vunpack.c.l.b16 %v2349
        %v2421 = vunpack.c.l.b16 %v2350
        %v2422 = vunpack.c.l.b16 %v2351
        %v2423 = vunpack.c.l.b16 %v2352
        %v2424 = vunpack.c.l.b16 %v2353
        %v2425 = vunpack.c.l.b16 %v2354
        %v2426 = vunpack.c.l.b16 %v2355
        %v2427 = vunpack.c.l.b16 %v2356
        %v2428 = vunpack.c.l.b16 %v2357
        %v2429 = vunpack.c.l.b16 %v2358
        %v2430 = vunpack.c.l.b16 %v2359
        %v2431 = vunpack.c.l.b16 %v2360
        %v2432 = vunpack.c.l.b16 %v2361
        %v2433 = vunpack.c.l.b16 %v2362
        %v2434 = vunpack.c.l.b16 %v2363
        %v2435 = vunpack.c.l.b16 %v2364
        %v2436 = vunpack.c.l.b16 %v2365
        %v2437 = vunpack.c.l.b16 %v2366
        %v2438 = vunpack.c.l.b16 %v2367
        %v2439 = vunpack.c.l.b16 %v2368
        %v2440 = vunpack.c.l.b16 %v2369
        %v2441 = vunpack.c.l.b16 %v2370
        %v2442 = vunpack.c.l.b16 %v2371
        %v2443 = vunpack.c.l.b16 %v2372
        %v2444 = vpack.c.b16 %v2413, %v2412
        %v2445 = vpack.c.b16 %v2415, %v2414
        %v2446 = vpack.c.b16 %v2417, %v2416
        %v2447 = vpack.c.b16 %v2419, %v2418
        %v2448 = vpack.c.b16 %v2421, %v2420
        %v2449 = vpack.c.b16 %v2423, %v2422
        %v2450 = vpack.c.b16 %v2425, %v2424
        %v2451 = vpack.c.b16 %v2427, %v2426
        %v2452 = vpack.c.b16 %v2429, %v2428
        %v2453 = vpack.c.b16 %v2431, %v2430
        %v2454 = vpack.c.b16 %v2433, %v2432
        %v2455 = vpack.c.b16 %v2435, %v2434
        %v2456 = vpack.c.b16 %v2437, %v2436
        %v2457 = vpack.c.b16 %v2439, %v2438
        %v2458 = vpack.c.b16 %v2441, %v2440
        %v2459 = vpack.c.b16 %v2443, %v2442
        %2476 = vmatprep.subr.bf16.mxu0 0
        %2477 = vmatpush1.bf16.msra.mxu0 %v2444
        %2478 = vmatprep.subr.bf16.mxu0 0
        %2479 = vmatpush1.bf16.msra.mxu0 %v2445
        %2480 = vmatprep.subr.bf16.mxu0 0
        %2481 = vmatpush1.bf16.msra.mxu0 %v2446
        %2482 = vmatprep.subr.bf16.mxu0 0
        %2483 = vmatpush1.bf16.msra.mxu0 %v2447
        %2484 = vmatprep.subr.bf16.mxu0 0
        %2485 = vmatpush1.bf16.msra.mxu0 %v2448
        %2486 = vmatprep.subr.bf16.mxu0 0
        %2487 = vmatpush1.bf16.msra.mxu0 %v2449
        %2488 = vmatprep.subr.bf16.mxu0 0
        %2489 = vmatpush1.bf16.msra.mxu0 %v2450
        %2490 = vmatprep.subr.bf16.mxu0 0
        %2491 = vmatpush1.bf16.msra.mxu0 %v2451
        %2492 = vmatprep.subr.bf16.mxu0 0
        %2493 = vmatpush1.bf16.msra.mxu0 %v2452
        %2494 = vmatprep.subr.bf16.mxu0 0
        %2495 = vmatpush1.bf16.msra.mxu0 %v2453
        %2496 = vmatprep.subr.bf16.mxu0 0
        %2497 = vmatpush1.bf16.msra.mxu0 %v2454
        %2498 = vmatprep.subr.bf16.mxu0 0
        %2499 = vmatpush1.bf16.msra.mxu0 %v2455
        %2500 = vmatprep.subr.bf16.mxu0 0
        %2501 = vmatpush1.bf16.msra.mxu0 %v2456
        %2502 = vmatprep.subr.bf16.mxu0 0
        %2503 = vmatpush1.bf16.msra.mxu0 %v2457
        %2504 = vmatprep.subr.bf16.mxu0 0
        %2505 = vmatpush1.bf16.msra.mxu0 %v2458
        %2506 = vmatprep.subr.bf16.mxu0 0
        %2507 = vmatpush1.bf16.msra.mxu0 %v2459
        %2508 = vmatprep.mubr.bf16.mxu0 %v2338
        %2509 = vmatmul.mubr.bf16.gmra.mrb[0].mxu0 %v2337
        %v2510 = vpop.f32.mrb[0].mxu0
        %v2511 = vadd.f32 %v2378, %v2510
        %v2512 = vpop.f32.mrb[0].mxu0
        %v2513 = vpop.f32.mrb[0].mxu0
        %v2514 = vadd.f32 %v2378, %v2513
        %v2515 = vpop.f32.mrb[0].mxu0
        %2516 = vmatprep.mubr.bf16.mxu0 %v2340
        %2517 = vmatmul.mubr.bf16.gmra.mrb[0].mxu0 %v2339
        %v2518 = vpop.f32.mrb[0].mxu0
        %v2519 = vadd.f32 %v2378, %v2518
        %v2520 = vpop.f32.mrb[0].mxu0
        %v2521 = vpop.f32.mrb[0].mxu0
        %v2522 = vadd.f32 %v2378, %v2521
        %v2523 = vpop.f32.mrb[0].mxu0
        %2524 = vdwg.mxu0
        %v2525 = vadd.f32 %v2074, %v2511
        %v2526 = vadd.f32 %v2075, %v2514
        %v2527 = vadd.f32 %v2076, %v2519
        %v2528 = vadd.f32 %v2077, %v2522
        %2529 = vst.msk [vmem:[%s574] sm:$0xff] %vm590, %v2525
        %2530 = vst.msk [vmem:[%s574 + $0x8] sm:$0xff] %vm590, %v2526
        %2531 = vst.msk [vmem:[%s574 + $0x10] sm:$0xff] %vm590, %v2527
        %2532 = vst.msk [vmem:[%s574 + $0x18] sm:$0xff] %vm590, %v2528
        %s2533 = sand.u32 %s403, 1
        %s2534 = scalar_lea.sflag [#allocation5], %s2533
        %s2535 = sand.u32 %s403, 1
        %s2536 = smul.addr %s2535, 32
        %s2537 = scalar_lea.vmem [#allocation8], %s2536
        // Predicated region
        $region97: #{tpu_custom_call.1} parent=87 // pred_check
          %p2538 = pneg %p413
        $region98: #{tpu_custom_call.1} parent=87 // pred_check_branch
          %2540 = sbr.rel (%p2538) target = $region100
        $region99: #{tpu_custom_call.1} parent=87 // pred_region
          %s2541 = smul.u32 2, %s33
          %s2543 = ssub.s32 512, 512
          %2544 = vsyncadd %s2534, %s2543
          %s2545 = smul.addr %s2541, 2
          %s2546 = smul.addr %s2545, 128
          %s2547 = scalar_lea.hbm %s17, %s2546
          %s2548 = sshll.u32 %s2537, 4
          %s2549 = int_to_ptr.vmem [resolvable:$true] %s2548
          %2554 = dma.vmem_to_hbm [thread:$0]  %s2549, 512, %s2547, %s2534, 128, 128, 8
        $region100: #{tpu_custom_call.1} parent=87 // pred_fallthru
          _
      $region88: #{tpu_custom_call.1} parent=5 // pred_fallthru
        _
      %p2555 = scmp.le.s32.totalorder 2, %s28
      // Predicated region
      $region101: #{tpu_custom_call.1} parent=5 // pred_check
        %p2556 = pneg %p2555
      $region102: #{tpu_custom_call.1} parent=5 // pred_check_branch
        %2558 = sbr.rel (%p2556) target = $region104
      $region103: #{tpu_custom_call.1} parent=5 // pred_region
        %s2559 = ssub.s32 %s28, 2
        // Predicated region
        $region105: #{tpu_custom_call.1} parent=103 // pred_check
          %p2560 = pneg %p419
        $region106: #{tpu_custom_call.1} parent=103 // pred_check_branch
          %2562 = sbr.rel (%p2560) target = $region108
        $region107: #{tpu_custom_call.1} parent=103 // pred_region
          %s2563 = sand.u32 %s404, 1
          %s2564 = scalar_lea.sflag [#allocation5], %s2563
          %s2565 = sand.u32 %s404, 1
          %s2566 = smul.addr %s2565, 32
          %s2567 = scalar_lea.vmem [#allocation8], %s2566
          %2568 = dma.done %s2564, 512
        $region108: #{tpu_custom_call.1} parent=103 // pred_fallthru
          _
      $region104: #{tpu_custom_call.1} parent=5 // pred_fallthru
        _
    $region6: #{tpu_custom_call.1} parent=1 // loop_footer
      %s32 = sadd.s32 1, %s28
    $region7: #{tpu_custom_call.1} parent=1 // loop_footer_branch
      %27 = sbr.rel target = $region3
    $region8: #{tpu_custom_call.1} parent=1 // loop_exit
      _
    %2569 = vsyncpa [#allocation4], 1
    %s2570 = scalar_lea.sflag [#allocation4], 1
    %2571 = vsyncpa %s2570, 1
    %2572 = vsyncpa [#allocation7], 1
    %2573 = vsyncpa [#allocation5], 1
    %s2574 = scalar_lea.sflag [#allocation5], 1
    %2575 = vsyncpa %s2574, 1

</llo_original>
